<compile_context>
chip_gen: v5e
topology: v5e:2x2
jax: 0.10.0
libtpu: 0.0.40
codegen_flags: <defaults>
</compile_context>

<pallas_src>
import functools
import math

import jax
import jax.numpy as jnp
from jax.experimental import pallas as pl
from jax.experimental.pallas import tpu as pltpu


# ----------------------------- Pallas kernel -----------------------------

def _upblock_kernel(xlow_ref, down_ref, wup_ref, ubig_ref, bup_ref,
                    w1_ref, b1_ref, g1_ref, be1_ref,
                    w2_ref, b2_ref, g2_ref, be2_ref,
                    mtot_ref, mfr_ref, out_ref,
                    *, margin, nfr, pw, cnt, eps):
    """Entire UpBlock forward on the channels-first, lane-dense padded-frame layout.

    Lane layout: each of the N images is a zero-ring padded (H2+2)x(W2+2) frame,
    frames concatenated along lanes, plus `margin` zero lanes at both ends so the
    9 conv-tap slices stay in bounds (cross-image bleed only hits masked ring lanes).
    """
    f32, bf16 = jnp.float32, jnp.bfloat16
    inv_cnt = 1.0 / cnt
    taps = [(kh - 1) * pw + (kw - 1) for kh in range(3) for kw in range(3)]

    mtot = mtot_ref[...]          # [1, LTOT]  1.0 on real pixels, 0 on ring/margins
    mfr = mfr_ref[...]            # [1, NFR]

    def conv3x3(x_tot, w_ref, b_ref):
        # ONE stacked-K MXU matmul over all 9 taps, all channels, all N images.
        x9 = jnp.concatenate(
            [x_tot[:, margin + s: margin + s + nfr] for s in taps], axis=0)
        return jnp.dot(w_ref[...], x9.astype(bf16),
                       preferred_element_type=f32) + b_ref[...]

    # --- up path: 1x1 conv on low-res rows, then bilinear 2x upsample scattered
    #     straight into padded-frame lanes (both matmuls kept in f32). ---------
    t = jnp.dot(wup_ref[...], xlow_ref[...], preferred_element_type=f32)   # [Cout, N*HW]
    up = jnp.dot(t, ubig_ref[...], preferred_element_type=f32)             # [Cout, LTOT]
    up = up + bup_ref[...] * mtot                  # bias only on real pixels (ring stays 0)

    # --- concat([up, from_down]) along channels in VMEM; conv1 + ReLU --------
    x = jnp.concatenate([up, down_ref[...]], axis=0)                       # [2*Cout, LTOT]
    y = jnp.maximum(conv3x3(x, w1_ref, b1_ref), 0.0) * mfr                 # [Cout, NFR]

    # --- BatchNorm1 (batch stats over all N images; centered two-pass var) ---
    mean1 = jnp.sum(y, axis=1, keepdims=True) * inv_cnt
    d1 = (y - mean1) * mfr
    var1 = jnp.sum(d1 * d1, axis=1, keepdims=True) * inv_cnt
    s1 = g1_ref[...] * jax.lax.rsqrt(var1 + eps)
    ybn = (d1 * s1 + be1_ref[...]) * mfr           # exact zeros on the conv pad ring
    zpad = jnp.zeros((ybn.shape[0], margin), f32)
    ybn_tot = jnp.concatenate([zpad, ybn, zpad], axis=1)                   # [Cout, LTOT]

    # --- conv2 (single stacked-tap matmul) ------------------------------------
    z = conv3x3(ybn_tot, w2_ref, b2_ref) * mfr                             # [Cout, NFR]

    # --- BatchNorm2 + ReLU -----------------------------------------------------
    mean2 = jnp.sum(z, axis=1, keepdims=True) * inv_cnt
    d2 = (z - mean2) * mfr
    var2 = jnp.sum(d2 * d2, axis=1, keepdims=True) * inv_cnt
    s2 = g2_ref[...] * jax.lax.rsqrt(var2 + eps)
    out_ref[...] = jnp.maximum(d2 * s2 + be2_ref[...], 0.0) * mfr


# ----------------------------- host-side glue -----------------------------

def _bilinear_matrix(n_in, n_out):
    """torch.nn.Upsample(mode='bilinear', align_corners=False) interpolation matrix."""
    dst = jnp.arange(n_out, dtype=jnp.float32)
    src = jnp.clip((dst + 0.5) * (n_in / n_out) - 0.5, 0.0, n_in - 1)
    i0 = jnp.floor(src).astype(jnp.int32)
    i1 = jnp.minimum(i0 + 1, n_in - 1)
    w1 = src - i0.astype(jnp.float32)
    w0 = 1.0 - w1
    U = jnp.zeros((n_out, n_in), jnp.float32)
    U = U.at[jnp.arange(n_out), i0].add(w0)
    U = U.at[jnp.arange(n_out), i1].add(w1)
    return U


def init_params(key, in_channels, out_channels, ksize=3):
    ks = jax.random.split(key, 3)

    def conv_init(k, cout, cin, kh, kw):
        kw_, kb_ = jax.random.split(k)
        bound = 1.0 / math.sqrt(cin * kh * kw)
        w = jax.random.uniform(kw_, (cout, cin, kh, kw), jnp.float32, -bound, bound)
        b = jax.random.uniform(kb_, (cout,), jnp.float32, -bound, bound)
        return w, b

    w_up, b_up = conv_init(ks[0], out_channels, in_channels, 1, 1)
    w1, b1 = conv_init(ks[1], out_channels, 2 * out_channels, ksize, ksize)
    w2, b2 = conv_init(ks[2], out_channels, out_channels, ksize, ksize)
    return dict(
        w_up=w_up, b_up=b_up,
        w1=w1, b1=b1, g1=jnp.ones((out_channels,), jnp.float32),
        be1=jnp.zeros((out_channels,), jnp.float32),
        w2=w2, b2=b2, g2=jnp.ones((out_channels,), jnp.float32),
        be2=jnp.zeros((out_channels,), jnp.float32),
    )


def upblock_forward(params, from_down, from_up, *, eps=1e-5):
    """from_down: NCHW [N, Cout, 2H, 2W]; from_up: NCHW [N, Cin, H, W]; returns NCHW."""
    N, Cin, H, W = from_up.shape
    Cout = params["w_up"].shape[0]
    H2, W2 = 2 * H, 2 * W
    PH, PW = H2 + 2, W2 + 2                 # zero-padded 3x3-conv frame (pad=1)
    FR = PH * PW                            # flattened frame length per image
    MARGIN = PW + 1                         # >= max |tap shift|
    HW = H * W
    NFR = N * FR                            # all images stacked along lanes
    LTOT = NFR + 2 * MARGIN
    cnt = float(N * H2 * W2)
    f32, bf16 = jnp.float32, jnp.bfloat16

    # --- shape-only constants (constant-folded under jit) ---
    Uh = _bilinear_matrix(H, H2)
    Uw = _bilinear_matrix(W, W2)
    Ukron = jnp.kron(Uh, Uw)                                       # [H2*W2, HW]
    h2g, w2g = jnp.meshgrid(jnp.arange(H2), jnp.arange(W2), indexing="ij")
    lanes = ((h2g + 1) * PW + (w2g + 1)).reshape(-1)               # frame lane of each real pixel
    u_frame = jnp.zeros((HW, FR), f32).at[:, lanes].set(Ukron.T)   # upsample -> padded frame
    u_big = jnp.pad(jnp.kron(jnp.eye(N, dtype=f32), u_frame),      # block-diag over images
                    ((0, 0), (MARGIN, MARGIN)))                    # [N*HW, LTOT]
    real = (jnp.arange(N)[:, None] * FR + lanes[None, :]).reshape(-1)
    mask_fr = jnp.zeros((1, NFR), f32).at[0, real].set(1.0)        # 1.0 on real pixels
    mask_tot = jnp.pad(mask_fr, ((0, 0), (MARGIN, MARGIN)))        # [1, LTOT]

    # --- weights in kernel layout (stacked-tap flat weights for the 3x3 convs) ---
    w_up = params["w_up"].reshape(Cout, Cin).astype(f32)
    b_up = params["b_up"].reshape(Cout, 1).astype(f32)
    w1 = params["w1"].transpose(0, 2, 3, 1).reshape(Cout, 9 * 2 * Cout).astype(bf16)
    b1 = params["b1"].reshape(Cout, 1).astype(f32)
    g1 = params["g1"].reshape(Cout, 1).astype(f32)
    be1 = params["be1"].reshape(Cout, 1).astype(f32)
    w2 = params["w2"].transpose(0, 2, 3, 1).reshape(Cout, 9 * Cout).astype(bf16)
    b2 = params["b2"].reshape(Cout, 1).astype(f32)
    g2 = params["g2"].reshape(Cout, 1).astype(f32)
    be2 = params["be2"].reshape(Cout, 1).astype(f32)

    # --- inputs: channels-first, all N images stacked along lanes ---
    x_low = from_up.astype(f32).transpose(1, 0, 2, 3).reshape(Cin, N * HW)
    down = jnp.pad(from_down.astype(f32), ((0, 0), (0, 0), (1, 1), (1, 1)))
    down = down.transpose(1, 0, 2, 3).reshape(Cout, NFR)
    down = jnp.pad(down, ((0, 0), (MARGIN, MARGIN)))               # [Cout, LTOT]

    full = lambda shp: pl.BlockSpec(shp, lambda i: (0, 0))

    out_full = pl.pallas_call(
        functools.partial(_upblock_kernel, margin=MARGIN, nfr=NFR, pw=PW,
                          cnt=cnt, eps=eps),
        out_shape=jax.ShapeDtypeStruct((Cout, NFR), f32),
        grid=(1,),
        in_specs=[full((Cin, N * HW)),            # x_low
                  full((Cout, LTOT)),             # down (padded frame)
                  full((Cout, Cin)),              # w_up
                  full((N * HW, LTOT)),           # u_big (upsample scatter matrix)
                  full((Cout, 1)),                # b_up
                  full((Cout, 9 * 2 * Cout)),     # w1 (stacked taps)
                  full((Cout, 1)), full((Cout, 1)), full((Cout, 1)),   # b1, g1, be1
                  full((Cout, 9 * Cout)),         # w2 (stacked taps)
                  full((Cout, 1)), full((Cout, 1)), full((Cout, 1)),   # b2, g2, be2
                  full((1, LTOT)), full((1, NFR))],                    # masks
        out_specs=full((Cout, NFR)),
        compiler_params=pltpu.CompilerParams(dimension_semantics=("arbitrary",)),
    )(x_low, down, w_up, u_big, b_up, w1, b1, g1, be1, w2, b2, g2, be2,
      mask_tot, mask_fr)

    # --- extract interior pixels back to NCHW (pure layout work, under jit) ---
    frames = out_full.reshape(Cout, N, PH, PW)
    return frames[:, :, 1:1 + H2, 1:1 + W2].transpose(1, 0, 2, 3)


# --------------------------------- main ---------------------------------

if __name__ == "__main__":
    in_channels, out_channels = 8, 8
    N, H, W = 2, 8, 8

    key = jax.random.PRNGKey(0)
    k_down, k_up, k_params = jax.random.split(key, 3)

    from_up = jax.random.normal(k_up, (N, in_channels, H, W), jnp.float32)               # NCHW
    from_down = jax.random.normal(k_down, (N, out_channels, 2 * H, 2 * W), jnp.float32)  # NCHW
    params = init_params(k_params, in_channels, out_channels, ksize=3)

    fwd = jax.jit(upblock_forward)
    out = jax.block_until_ready(fwd(params, from_down, from_up))
    assert out.shape == (N, out_channels, 2 * H, 2 * W)
    assert bool(jnp.all(jnp.isfinite(out)))
    print("KERNEL_OK")
</pallas_src>

<mosaic_0001>
module attributes {stable_mosaic.version = 11 : i64} {
  func.func @_upblock_kernel(%arg0: i32, %arg1: memref<8x128xf32, #tpu.memory_space<vmem>>, %arg2: memref<8x686xf32, #tpu.memory_space<vmem>>, %arg3: memref<8x8xf32, #tpu.memory_space<vmem>>, %arg4: memref<128x686xf32, #tpu.memory_space<vmem>>, %arg5: memref<8x1xf32, #tpu.memory_space<vmem>>, %arg6: memref<8x144xbf16, #tpu.memory_space<vmem>>, %arg7: memref<8x1xf32, #tpu.memory_space<vmem>>, %arg8: memref<8x1xf32, #tpu.memory_space<vmem>>, %arg9: memref<8x1xf32, #tpu.memory_space<vmem>>, %arg10: memref<8x72xbf16, #tpu.memory_space<vmem>>, %arg11: memref<8x1xf32, #tpu.memory_space<vmem>>, %arg12: memref<8x1xf32, #tpu.memory_space<vmem>>, %arg13: memref<8x1xf32, #tpu.memory_space<vmem>>, %arg14: memref<1x686xf32, #tpu.memory_space<vmem>>, %arg15: memref<1x648xf32, #tpu.memory_space<vmem>>, %arg16: memref<8x648xf32, #tpu.memory_space<vmem>>) attributes {dimension_semantics = [#tpu.dimension_semantics<arbitrary>], iteration_bounds = array<i64: 1>, scalar_prefetch = 0 : i64, scratch_operands = 0 : i64, tpu.core_type = #tpu.core_type<tc>, window_params = [{pipeline_mode = #tpu.pipeline_mode<synchronous>, transform_indices = @transform_0, window_bounds = array<i64: 8, 128>}, {pipeline_mode = #tpu.pipeline_mode<synchronous>, transform_indices = @transform_1, window_bounds = array<i64: 8, 686>}, {pipeline_mode = #tpu.pipeline_mode<synchronous>, transform_indices = @transform_2, window_bounds = array<i64: 8, 8>}, {pipeline_mode = #tpu.pipeline_mode<synchronous>, transform_indices = @transform_3, window_bounds = array<i64: 128, 686>}, {pipeline_mode = #tpu.pipeline_mode<synchronous>, transform_indices = @transform_4, window_bounds = array<i64: 8, 1>}, {pipeline_mode = #tpu.pipeline_mode<synchronous>, transform_indices = @transform_5, window_bounds = array<i64: 8, 144>}, {pipeline_mode = #tpu.pipeline_mode<synchronous>, transform_indices = @transform_6, window_bounds = array<i64: 8, 1>}, {pipeline_mode = #tpu.pipeline_mode<synchronous>, transform_indices = @transform_7, window_bounds = array<i64: 8, 1>}, {pipeline_mode = #tpu.pipeline_mode<synchronous>, transform_indices = @transform_8, window_bounds = array<i64: 8, 1>}, {pipeline_mode = #tpu.pipeline_mode<synchronous>, transform_indices = @transform_9, window_bounds = array<i64: 8, 72>}, {pipeline_mode = #tpu.pipeline_mode<synchronous>, transform_indices = @transform_10, window_bounds = array<i64: 8, 1>}, {pipeline_mode = #tpu.pipeline_mode<synchronous>, transform_indices = @transform_11, window_bounds = array<i64: 8, 1>}, {pipeline_mode = #tpu.pipeline_mode<synchronous>, transform_indices = @transform_12, window_bounds = array<i64: 8, 1>}, {pipeline_mode = #tpu.pipeline_mode<synchronous>, transform_indices = @transform_13, window_bounds = array<i64: 1, 686>}, {pipeline_mode = #tpu.pipeline_mode<synchronous>, transform_indices = @transform_14, window_bounds = array<i64: 1, 648>}, {pipeline_mode = #tpu.pipeline_mode<synchronous>, transform_indices = @transform_15, window_bounds = array<i64: 8, 648>}]} {
    %c0 = arith.constant 0 : index
    %c0_0 = arith.constant 0 : index
    %0 = vector.load %arg14[%c0, %c0_0] : memref<1x686xf32, #tpu.memory_space<vmem>>, vector<1x686xf32>
    %c0_1 = arith.constant 0 : index
    %c0_2 = arith.constant 0 : index
    %1 = vector.load %arg15[%c0_1, %c0_2] : memref<1x648xf32, #tpu.memory_space<vmem>>, vector<1x648xf32>
    %c0_3 = arith.constant 0 : index
    %c0_4 = arith.constant 0 : index
    %2 = vector.load %arg3[%c0_3, %c0_4] : memref<8x8xf32, #tpu.memory_space<vmem>>, vector<8x8xf32>
    %c0_5 = arith.constant 0 : index
    %c0_6 = arith.constant 0 : index
    %3 = vector.load %arg1[%c0_5, %c0_6] : memref<8x128xf32, #tpu.memory_space<vmem>>, vector<8x128xf32>
    %cst = arith.constant dense<0.000000e+00> : vector<8x128xf32>
    %4 = tpu.matmul %2, %3, %cst {dimension_numbers = #tpu.dot_dimension_numbers<[1], [0], [0], [1], [0, 0, 1, 1], [], []>} : vector<8x8xf32>, vector<8x128xf32>, vector<8x128xf32> -> vector<8x128xf32>
    %c0_7 = arith.constant 0 : index
    %c0_8 = arith.constant 0 : index
    %5 = vector.load %arg4[%c0_7, %c0_8] : memref<128x686xf32, #tpu.memory_space<vmem>>, vector<128x686xf32>
    %cst_9 = arith.constant dense<0.000000e+00> : vector<8x686xf32>
    %6 = tpu.matmul %4, %5, %cst_9 {dimension_numbers = #tpu.dot_dimension_numbers<[1], [0], [0], [1], [0, 0, 1, 1], [], []>} : vector<8x128xf32>, vector<128x686xf32>, vector<8x686xf32> -> vector<8x686xf32>
    %c0_10 = arith.constant 0 : index
    %c0_11 = arith.constant 0 : index
    %7 = vector.load %arg5[%c0_10, %c0_11] : memref<8x1xf32, #tpu.memory_space<vmem>>, vector<8x1xf32>
    %8 = vector.broadcast %7 : vector<8x1xf32> to vector<8x686xf32>
    %9 = vector.broadcast %0 : vector<1x686xf32> to vector<8x686xf32>
    %10 = arith.mulf %8, %9 : vector<8x686xf32>
    %11 = arith.addf %6, %10 : vector<8x686xf32>
    %c0_12 = arith.constant 0 : index
    %c0_13 = arith.constant 0 : index
    %12 = vector.load %arg2[%c0_12, %c0_13] : memref<8x686xf32, #tpu.memory_space<vmem>>, vector<8x686xf32>
    %13 = tpu.concatenate %11, %12 in 0 : vector<8x686xf32>, vector<8x686xf32> -> vector<16x686xf32>
    %14 = vector.extract_strided_slice %13 {offsets = [0, 0], sizes = [16, 648], strides = [1, 1]} : vector<16x686xf32> to vector<16x648xf32>
    %15 = vector.extract_strided_slice %13 {offsets = [0, 1], sizes = [16, 648], strides = [1, 1]} : vector<16x686xf32> to vector<16x648xf32>
    %16 = vector.extract_strided_slice %13 {offsets = [0, 2], sizes = [16, 648], strides = [1, 1]} : vector<16x686xf32> to vector<16x648xf32>
    %17 = vector.extract_strided_slice %13 {offsets = [0, 18], sizes = [16, 648], strides = [1, 1]} : vector<16x686xf32> to vector<16x648xf32>
    %18 = vector.extract_strided_slice %13 {offsets = [0, 19], sizes = [16, 648], strides = [1, 1]} : vector<16x686xf32> to vector<16x648xf32>
    %19 = vector.extract_strided_slice %13 {offsets = [0, 20], sizes = [16, 648], strides = [1, 1]} : vector<16x686xf32> to vector<16x648xf32>
    %20 = vector.extract_strided_slice %13 {offsets = [0, 36], sizes = [16, 648], strides = [1, 1]} : vector<16x686xf32> to vector<16x648xf32>
    %21 = vector.extract_strided_slice %13 {offsets = [0, 37], sizes = [16, 648], strides = [1, 1]} : vector<16x686xf32> to vector<16x648xf32>
    %22 = vector.extract_strided_slice %13 {offsets = [0, 38], sizes = [16, 648], strides = [1, 1]} : vector<16x686xf32> to vector<16x648xf32>
    %23 = tpu.concatenate %14, %15, %16, %17, %18, %19, %20, %21, %22 in 0 : vector<16x648xf32>, vector<16x648xf32>, vector<16x648xf32>, vector<16x648xf32>, vector<16x648xf32>, vector<16x648xf32>, vector<16x648xf32>, vector<16x648xf32>, vector<16x648xf32> -> vector<144x648xf32>
    %c0_14 = arith.constant 0 : index
    %c0_15 = arith.constant 0 : index
    %24 = vector.load %arg6[%c0_14, %c0_15] : memref<8x144xbf16, #tpu.memory_space<vmem>>, vector<8x144xbf16>
    %25 = arith.truncf %23 : vector<144x648xf32> to vector<144x648xbf16>
    %cst_16 = arith.constant dense<0.000000e+00> : vector<8x648xf32>
    %26 = tpu.matmul %24, %25, %cst_16 {dimension_numbers = #tpu.dot_dimension_numbers<[1], [0], [0], [1], [0, 0, 1, 1], [], []>} : vector<8x144xbf16>, vector<144x648xbf16>, vector<8x648xf32> -> vector<8x648xf32>
    %c0_17 = arith.constant 0 : index
    %c0_18 = arith.constant 0 : index
    %27 = vector.load %arg7[%c0_17, %c0_18] : memref<8x1xf32, #tpu.memory_space<vmem>>, vector<8x1xf32>
    %28 = vector.broadcast %27 : vector<8x1xf32> to vector<8x648xf32>
    %29 = arith.addf %26, %28 : vector<8x648xf32>
    %cst_19 = arith.constant 0.000000e+00 : f32
    %30 = vector.broadcast %cst_19 : f32 to vector<8x648xf32>
    %31 = arith.maximumf %29, %30 : vector<8x648xf32>
    %32 = vector.broadcast %1 : vector<1x648xf32> to vector<8x648xf32>
    %33 = arith.mulf %31, %32 : vector<8x648xf32>
    %cst_20 = arith.constant dense<0.000000e+00> : vector<8xf32>
    %34 = vector.multi_reduction <add>, %33, %cst_20 [1] : vector<8x648xf32> to vector<8xf32>
    %35 = vector.shape_cast %34 : vector<8xf32> to vector<8x1xf32>
    %cst_21 = arith.constant 0.001953125 : f32
    %36 = vector.broadcast %cst_21 : f32 to vector<8x1xf32>
    %37 = arith.mulf %35, %36 : vector<8x1xf32>
    %38 = vector.broadcast %37 : vector<8x1xf32> to vector<8x648xf32>
    %39 = arith.subf %33, %38 : vector<8x648xf32>
    %40 = vector.broadcast %1 : vector<1x648xf32> to vector<8x648xf32>
    %41 = arith.mulf %39, %40 : vector<8x648xf32>
    %42 = arith.mulf %41, %41 : vector<8x648xf32>
    %cst_22 = arith.constant dense<0.000000e+00> : vector<8xf32>
    %43 = vector.multi_reduction <add>, %42, %cst_22 [1] : vector<8x648xf32> to vector<8xf32>
    %44 = vector.shape_cast %43 : vector<8xf32> to vector<8x1xf32>
    %cst_23 = arith.constant 0.001953125 : f32
    %45 = vector.broadcast %cst_23 : f32 to vector<8x1xf32>
    %46 = arith.mulf %44, %45 : vector<8x1xf32>
    %c0_24 = arith.constant 0 : index
    %c0_25 = arith.constant 0 : index
    %47 = vector.load %arg8[%c0_24, %c0_25] : memref<8x1xf32, #tpu.memory_space<vmem>>, vector<8x1xf32>
    %cst_26 = arith.constant 9.99999974E-6 : f32
    %48 = vector.broadcast %cst_26 : f32 to vector<8x1xf32>
    %49 = arith.addf %46, %48 : vector<8x1xf32>
    %50 = math.rsqrt %49 : vector<8x1xf32>
    %51 = arith.mulf %47, %50 : vector<8x1xf32>
    %52 = vector.broadcast %51 : vector<8x1xf32> to vector<8x648xf32>
    %53 = arith.mulf %41, %52 : vector<8x648xf32>
    %c0_27 = arith.constant 0 : index
    %c0_28 = arith.constant 0 : index
    %54 = vector.load %arg9[%c0_27, %c0_28] : memref<8x1xf32, #tpu.memory_space<vmem>>, vector<8x1xf32>
    %55 = vector.broadcast %54 : vector<8x1xf32> to vector<8x648xf32>
    %56 = arith.addf %53, %55 : vector<8x648xf32>
    %57 = vector.broadcast %1 : vector<1x648xf32> to vector<8x648xf32>
    %58 = arith.mulf %56, %57 : vector<8x648xf32>
    %cst_29 = arith.constant 0.000000e+00 : f32
    %59 = vector.broadcast %cst_29 : f32 to vector<8x19xf32>
    %60 = tpu.concatenate %59, %58, %59 in 1 : vector<8x19xf32>, vector<8x648xf32>, vector<8x19xf32> -> vector<8x686xf32>
    %61 = vector.extract_strided_slice %60 {offsets = [0, 0], sizes = [8, 648], strides = [1, 1]} : vector<8x686xf32> to vector<8x648xf32>
    %62 = vector.extract_strided_slice %60 {offsets = [0, 1], sizes = [8, 648], strides = [1, 1]} : vector<8x686xf32> to vector<8x648xf32>
    %63 = vector.extract_strided_slice %60 {offsets = [0, 2], sizes = [8, 648], strides = [1, 1]} : vector<8x686xf32> to vector<8x648xf32>
    %64 = vector.extract_strided_slice %60 {offsets = [0, 18], sizes = [8, 648], strides = [1, 1]} : vector<8x686xf32> to vector<8x648xf32>
    %65 = vector.extract_strided_slice %60 {offsets = [0, 19], sizes = [8, 648], strides = [1, 1]} : vector<8x686xf32> to vector<8x648xf32>
    %66 = vector.extract_strided_slice %60 {offsets = [0, 20], sizes = [8, 648], strides = [1, 1]} : vector<8x686xf32> to vector<8x648xf32>
    %67 = vector.extract_strided_slice %60 {offsets = [0, 36], sizes = [8, 648], strides = [1, 1]} : vector<8x686xf32> to vector<8x648xf32>
    %68 = vector.extract_strided_slice %60 {offsets = [0, 37], sizes = [8, 648], strides = [1, 1]} : vector<8x686xf32> to vector<8x648xf32>
    %69 = vector.extract_strided_slice %60 {offsets = [0, 38], sizes = [8, 648], strides = [1, 1]} : vector<8x686xf32> to vector<8x648xf32>
    %70 = tpu.concatenate %61, %62, %63, %64, %65, %66, %67, %68, %69 in 0 : vector<8x648xf32>, vector<8x648xf32>, vector<8x648xf32>, vector<8x648xf32>, vector<8x648xf32>, vector<8x648xf32>, vector<8x648xf32>, vector<8x648xf32>, vector<8x648xf32> -> vector<72x648xf32>
    %c0_30 = arith.constant 0 : index
    %c0_31 = arith.constant 0 : index
    %71 = vector.load %arg10[%c0_30, %c0_31] : memref<8x72xbf16, #tpu.memory_space<vmem>>, vector<8x72xbf16>
    %72 = arith.truncf %70 : vector<72x648xf32> to vector<72x648xbf16>
    %cst_32 = arith.constant dense<0.000000e+00> : vector<8x648xf32>
    %73 = tpu.matmul %71, %72, %cst_32 {dimension_numbers = #tpu.dot_dimension_numbers<[1], [0], [0], [1], [0, 0, 1, 1], [], []>} : vector<8x72xbf16>, vector<72x648xbf16>, vector<8x648xf32> -> vector<8x648xf32>
    %c0_33 = arith.constant 0 : index
    %c0_34 = arith.constant 0 : index
    %74 = vector.load %arg11[%c0_33, %c0_34] : memref<8x1xf32, #tpu.memory_space<vmem>>, vector<8x1xf32>
    %75 = vector.broadcast %74 : vector<8x1xf32> to vector<8x648xf32>
    %76 = arith.addf %73, %75 : vector<8x648xf32>
    %77 = vector.broadcast %1 : vector<1x648xf32> to vector<8x648xf32>
    %78 = arith.mulf %76, %77 : vector<8x648xf32>
    %cst_35 = arith.constant dense<0.000000e+00> : vector<8xf32>
    %79 = vector.multi_reduction <add>, %78, %cst_35 [1] : vector<8x648xf32> to vector<8xf32>
    %80 = vector.shape_cast %79 : vector<8xf32> to vector<8x1xf32>
    %cst_36 = arith.constant 0.001953125 : f32
    %81 = vector.broadcast %cst_36 : f32 to vector<8x1xf32>
    %82 = arith.mulf %80, %81 : vector<8x1xf32>
    %83 = vector.broadcast %82 : vector<8x1xf32> to vector<8x648xf32>
    %84 = arith.subf %78, %83 : vector<8x648xf32>
    %85 = vector.broadcast %1 : vector<1x648xf32> to vector<8x648xf32>
    %86 = arith.mulf %84, %85 : vector<8x648xf32>
    %87 = arith.mulf %86, %86 : vector<8x648xf32>
    %cst_37 = arith.constant dense<0.000000e+00> : vector<8xf32>
    %88 = vector.multi_reduction <add>, %87, %cst_37 [1] : vector<8x648xf32> to vector<8xf32>
    %89 = vector.shape_cast %88 : vector<8xf32> to vector<8x1xf32>
    %cst_38 = arith.constant 0.001953125 : f32
    %90 = vector.broadcast %cst_38 : f32 to vector<8x1xf32>
    %91 = arith.mulf %89, %90 : vector<8x1xf32>
    %c0_39 = arith.constant 0 : index
    %c0_40 = arith.constant 0 : index
    %92 = vector.load %arg12[%c0_39, %c0_40] : memref<8x1xf32, #tpu.memory_space<vmem>>, vector<8x1xf32>
    %cst_41 = arith.constant 9.99999974E-6 : f32
    %93 = vector.broadcast %cst_41 : f32 to vector<8x1xf32>
    %94 = arith.addf %91, %93 : vector<8x1xf32>
    %95 = math.rsqrt %94 : vector<8x1xf32>
    %96 = arith.mulf %92, %95 : vector<8x1xf32>
    %97 = vector.broadcast %96 : vector<8x1xf32> to vector<8x648xf32>
    %98 = arith.mulf %86, %97 : vector<8x648xf32>
    %c0_42 = arith.constant 0 : index
    %c0_43 = arith.constant 0 : index
    %99 = vector.load %arg13[%c0_42, %c0_43] : memref<8x1xf32, #tpu.memory_space<vmem>>, vector<8x1xf32>
    %100 = vector.broadcast %99 : vector<8x1xf32> to vector<8x648xf32>
    %101 = arith.addf %98, %100 : vector<8x648xf32>
    %cst_44 = arith.constant 0.000000e+00 : f32
    %102 = vector.broadcast %cst_44 : f32 to vector<8x648xf32>
    %103 = arith.maximumf %101, %102 : vector<8x648xf32>
    %104 = vector.broadcast %1 : vector<1x648xf32> to vector<8x648xf32>
    %105 = arith.mulf %103, %104 : vector<8x648xf32>
    %c0_45 = arith.constant 0 : index
    %c0_46 = arith.constant 0 : index
    %106 = vector.load %arg16[%c0_45, %c0_46] : memref<8x648xf32, #tpu.memory_space<vmem>>, vector<8x648xf32>
    tpu.vector_store %arg16[%c0_45, %c0_46], %105 {strides = array<i32>} : memref<8x648xf32, #tpu.memory_space<vmem>>, vector<8x648xf32>,
    return
  }
  func.func @transform_0(%arg0: i32) -> (i32, i32) {
    %c0_i32 = arith.constant 0 : i32
    %c0_i32_0 = arith.constant 0 : i32
    %c0_i32_1 = arith.constant 0 : i32
    return %c0_i32, %c0_i32_0 : i32, i32
  }
  func.func @transform_1(%arg0: i32) -> (i32, i32) {
    %c0_i32 = arith.constant 0 : i32
    %c0_i32_0 = arith.constant 0 : i32
    %c0_i32_1 = arith.constant 0 : i32
    return %c0_i32, %c0_i32_0 : i32, i32
  }
  func.func @transform_2(%arg0: i32) -> (i32, i32) {
    %c0_i32 = arith.constant 0 : i32
    %c0_i32_0 = arith.constant 0 : i32
    %c0_i32_1 = arith.constant 0 : i32
    return %c0_i32, %c0_i32_0 : i32, i32
  }
  func.func @transform_3(%arg0: i32) -> (i32, i32) {
    %c0_i32 = arith.constant 0 : i32
    %c0_i32_0 = arith.constant 0 : i32
    %c0_i32_1 = arith.constant 0 : i32
    return %c0_i32, %c0_i32_0 : i32, i32
  }
  func.func @transform_4(%arg0: i32) -> (i32, i32) {
    %c0_i32 = arith.constant 0 : i32
    %c0_i32_0 = arith.constant 0 : i32
    %c0_i32_1 = arith.constant 0 : i32
    return %c0_i32, %c0_i32_0 : i32, i32
  }
  func.func @transform_5(%arg0: i32) -> (i32, i32) {
    %c0_i32 = arith.constant 0 : i32
    %c0_i32_0 = arith.constant 0 : i32
    %c0_i32_1 = arith.constant 0 : i32
    return %c0_i32, %c0_i32_0 : i32, i32
  }
  func.func @transform_6(%arg0: i32) -> (i32, i32) {
    %c0_i32 = arith.constant 0 : i32
    %c0_i32_0 = arith.constant 0 : i32
    %c0_i32_1 = arith.constant 0 : i32
    return %c0_i32, %c0_i32_0 : i32, i32
  }
  func.func @transform_7(%arg0: i32) -> (i32, i32) {
    %c0_i32 = arith.constant 0 : i32
    %c0_i32_0 = arith.constant 0 : i32
    %c0_i32_1 = arith.constant 0 : i32
    return %c0_i32, %c0_i32_0 : i32, i32
  }
  func.func @transform_8(%arg0: i32) -> (i32, i32) {
    %c0_i32 = arith.constant 0 : i32
    %c0_i32_0 = arith.constant 0 : i32
    %c0_i32_1 = arith.constant 0 : i32
    return %c0_i32, %c0_i32_0 : i32, i32
  }
  func.func @transform_9(%arg0: i32) -> (i32, i32) {
    %c0_i32 = arith.constant 0 : i32
    %c0_i32_0 = arith.constant 0 : i32
    %c0_i32_1 = arith.constant 0 : i32
    return %c0_i32, %c0_i32_0 : i32, i32
  }
  func.func @transform_10(%arg0: i32) -> (i32, i32) {
    %c0_i32 = arith.constant 0 : i32
    %c0_i32_0 = arith.constant 0 : i32
    %c0_i32_1 = arith.constant 0 : i32
    return %c0_i32, %c0_i32_0 : i32, i32
  }
  func.func @transform_11(%arg0: i32) -> (i32, i32) {
    %c0_i32 = arith.constant 0 : i32
    %c0_i32_0 = arith.constant 0 : i32
    %c0_i32_1 = arith.constant 0 : i32
    return %c0_i32, %c0_i32_0 : i32, i32
  }
  func.func @transform_12(%arg0: i32) -> (i32, i32) {
    %c0_i32 = arith.constant 0 : i32
    %c0_i32_0 = arith.constant 0 : i32
    %c0_i32_1 = arith.constant 0 : i32
    return %c0_i32, %c0_i32_0 : i32, i32
  }
  func.func @transform_13(%arg0: i32) -> (i32, i32) {
    %c0_i32 = arith.constant 0 : i32
    %c0_i32_0 = arith.constant 0 : i32
    %c0_i32_1 = arith.constant 0 : i32
    return %c0_i32, %c0_i32_0 : i32, i32
  }
  func.func @transform_14(%arg0: i32) -> (i32, i32) {
    %c0_i32 = arith.constant 0 : i32
    %c0_i32_0 = arith.constant 0 : i32
    %c0_i32_1 = arith.constant 0 : i32
    return %c0_i32, %c0_i32_0 : i32, i32
  }
  func.func @transform_15(%arg0: i32) -> (i32, i32) {
    %c0_i32 = arith.constant 0 : i32
    %c0_i32_0 = arith.constant 0 : i32
    %c0_i32_1 = arith.constant 0 : i32
    return %c0_i32, %c0_i32_0 : i32, i32
  }
}

</mosaic_0001>

<llo_original>
// kernel: upblock_forward.1
$region0: #{upblock_forward.1}
  #allocation0 [shape = 'u32[]', space=smem, size = 0x4, offset = 0x4, fixed_abs, tag = 'smem constant byte address 0x4 - core index']
  #allocation1 [shape = 'u32[72,128]{1,0:T(1,128)}', space=vmem, size = 0x9000, scoped, tag = 'internal scratch']
  %s0 = inlined_call_operand.vmem [shape: f32[8,128], index: 0, kind: input, shape index: {}]
  %s1 = inlined_call_operand.vmem [shape: f32[8,686], index: 1, kind: input, shape index: {}]
  %s2 = inlined_call_operand.vmem [shape: f32[8,8], index: 2, kind: input, shape index: {}]
  %s3 = inlined_call_operand.vmem [shape: f32[128,686], index: 3, kind: input, shape index: {}]
  %s4 = inlined_call_operand.vmem [shape: f32[8,1], index: 4, kind: input, shape index: {}]
  %s5 = inlined_call_operand.vmem [shape: bf16[8,144], index: 5, kind: input, shape index: {}]
  %s6 = inlined_call_operand.vmem [shape: f32[8,1], index: 6, kind: input, shape index: {}]
  %s7 = inlined_call_operand.vmem [shape: f32[8,1], index: 7, kind: input, shape index: {}]
  %s8 = inlined_call_operand.vmem [shape: f32[8,1], index: 8, kind: input, shape index: {}]
  %s9 = inlined_call_operand.vmem [shape: bf16[8,72], index: 9, kind: input, shape index: {}]
  %s10 = inlined_call_operand.vmem [shape: f32[8,1], index: 10, kind: input, shape index: {}]
  %s11 = inlined_call_operand.vmem [shape: f32[8,1], index: 11, kind: input, shape index: {}]
  %s12 = inlined_call_operand.vmem [shape: f32[8,1], index: 12, kind: input, shape index: {}]
  %s13 = inlined_call_operand.vmem [shape: f32[1,686], index: 13, kind: input, shape index: {}]
  %s14 = inlined_call_operand.vmem [shape: f32[1,648], index: 14, kind: input, shape index: {}]
  %s15 = inlined_call_operand.vmem [shape: f32[8,648], index: 15, kind: output, shape index: {}]
  %s16 = sld [smem:[#allocation0]]
  $region70: #{upblock_forward.1} parent=0
    _
  %s18 = ssub.s32 1, %s16
  %s19 = scalar_select 0, %s18, %s16
  // Predicated region
  $region2: #{upblock_forward.1} parent=0 // pred_check
    _
  $region3: #{upblock_forward.1} parent=0 // pred_check_branch
    %21 = sbr.rel (0) target = $region5
  $region4: #{upblock_forward.1} parent=0 // pred_region
    _
  $region5: #{upblock_forward.1} parent=0 // pred_fallthru
    _
  // Predicated region
  $region6: #{upblock_forward.1} parent=0 // pred_check
    _
  $region7: #{upblock_forward.1} parent=0 // pred_check_branch
    %23 = sbr.rel (0) target = $region9
  $region8: #{upblock_forward.1} parent=0 // pred_region
    _
  $region9: #{upblock_forward.1} parent=0 // pred_fallthru
    _
  // Predicated region
  $region10: #{upblock_forward.1} parent=0 // pred_check
    _
  $region11: #{upblock_forward.1} parent=0 // pred_check_branch
    %25 = sbr.rel (0) target = $region13
  $region12: #{upblock_forward.1} parent=0 // pred_region
    _
  $region13: #{upblock_forward.1} parent=0 // pred_fallthru
    _
  // Predicated region
  $region14: #{upblock_forward.1} parent=0 // pred_check
    _
  $region15: #{upblock_forward.1} parent=0 // pred_check_branch
    %27 = sbr.rel (0) target = $region17
  $region16: #{upblock_forward.1} parent=0 // pred_region
    _
  $region17: #{upblock_forward.1} parent=0 // pred_fallthru
    _
  // Predicated region
  $region18: #{upblock_forward.1} parent=0 // pred_check
    _
  $region19: #{upblock_forward.1} parent=0 // pred_check_branch
    %29 = sbr.rel (0) target = $region21
  $region20: #{upblock_forward.1} parent=0 // pred_region
    _
  $region21: #{upblock_forward.1} parent=0 // pred_fallthru
    _
  // Predicated region
  $region22: #{upblock_forward.1} parent=0 // pred_check
    _
  $region23: #{upblock_forward.1} parent=0 // pred_check_branch
    %31 = sbr.rel (0) target = $region25
  $region24: #{upblock_forward.1} parent=0 // pred_region
    _
  $region25: #{upblock_forward.1} parent=0 // pred_fallthru
    _
  // Predicated region
  $region26: #{upblock_forward.1} parent=0 // pred_check
    _
  $region27: #{upblock_forward.1} parent=0 // pred_check_branch
    %33 = sbr.rel (0) target = $region29
  $region28: #{upblock_forward.1} parent=0 // pred_region
    _
  $region29: #{upblock_forward.1} parent=0 // pred_fallthru
    _
  // Predicated region
  $region30: #{upblock_forward.1} parent=0 // pred_check
    _
  $region31: #{upblock_forward.1} parent=0 // pred_check_branch
    %35 = sbr.rel (0) target = $region33
  $region32: #{upblock_forward.1} parent=0 // pred_region
    _
  $region33: #{upblock_forward.1} parent=0 // pred_fallthru
    _
  // Predicated region
  $region34: #{upblock_forward.1} parent=0 // pred_check
    _
  $region35: #{upblock_forward.1} parent=0 // pred_check_branch
    %37 = sbr.rel (0) target = $region37
  $region36: #{upblock_forward.1} parent=0 // pred_region
    _
  $region37: #{upblock_forward.1} parent=0 // pred_fallthru
    _
  // Predicated region
  $region38: #{upblock_forward.1} parent=0 // pred_check
    _
  $region39: #{upblock_forward.1} parent=0 // pred_check_branch
    %39 = sbr.rel (0) target = $region41
  $region40: #{upblock_forward.1} parent=0 // pred_region
    _
  $region41: #{upblock_forward.1} parent=0 // pred_fallthru
    _
  // Predicated region
  $region42: #{upblock_forward.1} parent=0 // pred_check
    _
  $region43: #{upblock_forward.1} parent=0 // pred_check_branch
    %41 = sbr.rel (0) target = $region45
  $region44: #{upblock_forward.1} parent=0 // pred_region
    _
  $region45: #{upblock_forward.1} parent=0 // pred_fallthru
    _
  // Predicated region
  $region46: #{upblock_forward.1} parent=0 // pred_check
    _
  $region47: #{upblock_forward.1} parent=0 // pred_check_branch
    %43 = sbr.rel (0) target = $region49
  $region48: #{upblock_forward.1} parent=0 // pred_region
    _
  $region49: #{upblock_forward.1} parent=0 // pred_fallthru
    _
  // Predicated region
  $region50: #{upblock_forward.1} parent=0 // pred_check
    _
  $region51: #{upblock_forward.1} parent=0 // pred_check_branch
    %45 = sbr.rel (0) target = $region53
  $region52: #{upblock_forward.1} parent=0 // pred_region
    _
  $region53: #{upblock_forward.1} parent=0 // pred_fallthru
    _
  // Predicated region
  $region54: #{upblock_forward.1} parent=0 // pred_check
    _
  $region55: #{upblock_forward.1} parent=0 // pred_check_branch
    %47 = sbr.rel (0) target = $region57
  $region56: #{upblock_forward.1} parent=0 // pred_region
    _
  $region57: #{upblock_forward.1} parent=0 // pred_fallthru
    _
  // Predicated region
  $region58: #{upblock_forward.1} parent=0 // pred_check
    _
  $region59: #{upblock_forward.1} parent=0 // pred_check_branch
    %49 = sbr.rel (0) target = $region61
  $region60: #{upblock_forward.1} parent=0 // pred_region
    _
  $region61: #{upblock_forward.1} parent=0 // pred_fallthru
    _
  %v51 = vld [vmem:[%s13] sm:$0x3f]
  %v52 = vld [vmem:[%s14] sm:$0x3f]
  %v53 = vld [vmem:[%s2] sm:$0xff]
  %v54 = vld [vmem:[%s0] sm:$0xff]
  %vm55 = vcmask 64512
  %v57 = vsel %vm55, %v53, 0
  %59 = vmatpush.msra.mxu0 0.0
  %60 = vmatpush.msra.mxu0 0.0
  %61 = vmatpush.msra.mxu0 0.0
  %62 = vmatpush.msra.mxu0 0.0
  %63 = vmatpush.msra.mxu0 0.0
  %64 = vmatpush.msra.mxu0 0.0
  %65 = vmatpush.msra.mxu0 0.0
  %66 = vmatpush.msra.mxu0 0.0
  %67 = vmatpush.msra.mxu0 0.0
  %68 = vmatpush.msra.mxu0 0.0
  %69 = vmatpush.msra.mxu0 0.0
  %70 = vmatpush.msra.mxu0 0.0
  %71 = vmatpush.msra.mxu0 0.0
  %72 = vmatpush.msra.mxu0 0.0
  %73 = vmatpush.msra.mxu0 0.0
  %74 = vmatpush.msra.mxu0 %v54
  %75 = vmatmul.f32.gmra.mxu0 %v57
  %v76 = vpop.f32.mrf.mxu0
  %v77 = vadd.f32 0.0, %v76
  %78 = vdwg.mxu0
  %v79 = vld [vmem:[%s3] sm:$0xff]
  %v80 = vld [vmem:[%s3 + $0x8] sm:$0xff]
  %v81 = vld [vmem:[%s3 + $0x10] sm:$0xff]
  %v82 = vld [vmem:[%s3 + $0x18] sm:$0xff]
  %v83 = vld [vmem:[%s3 + $0x20] sm:$0xff]
  %v84 = vld [vmem:[%s3 + $0x28] sm:$0xff]
  %v85 = vld [vmem:[%s3 + $0x30] sm:$0xff]
  %v86 = vld [vmem:[%s3 + $0x38] sm:$0xff]
  %v87 = vld [vmem:[%s3 + $0x40] sm:$0xff]
  %v88 = vld [vmem:[%s3 + $0x48] sm:$0xff]
  %v89 = vld [vmem:[%s3 + $0x50] sm:$0xff]
  %v90 = vld [vmem:[%s3 + $0x58] sm:$0xff]
  %v91 = vld [vmem:[%s3 + $0x60] sm:$0xff]
  %v92 = vld [vmem:[%s3 + $0x68] sm:$0xff]
  %v93 = vld [vmem:[%s3 + $0x70] sm:$0xff]
  %v94 = vld [vmem:[%s3 + $0x78] sm:$0xff]
  %v95 = vld [vmem:[%s3 + $0x80] sm:$0xff]
  %v96 = vld [vmem:[%s3 + $0x88] sm:$0xff]
  %v97 = vld [vmem:[%s3 + $0x90] sm:$0xff]
  %v98 = vld [vmem:[%s3 + $0x98] sm:$0xff]
  %v99 = vld [vmem:[%s3 + $0xa0] sm:$0xff]
  %v100 = vld [vmem:[%s3 + $0xa8] sm:$0xff]
  %v101 = vld [vmem:[%s3 + $0xb0] sm:$0xff]
  %v102 = vld [vmem:[%s3 + $0xb8] sm:$0xff]
  %v103 = vld [vmem:[%s3 + $0xc0] sm:$0xff]
  %v104 = vld [vmem:[%s3 + $0xc8] sm:$0xff]
  %v105 = vld [vmem:[%s3 + $0xd0] sm:$0xff]
  %v106 = vld [vmem:[%s3 + $0xd8] sm:$0xff]
  %v107 = vld [vmem:[%s3 + $0xe0] sm:$0xff]
  %v108 = vld [vmem:[%s3 + $0xe8] sm:$0xff]
  %v109 = vld [vmem:[%s3 + $0xf0] sm:$0xff]
  %v110 = vld [vmem:[%s3 + $0xf8] sm:$0xff]
  %v111 = vld [vmem:[%s3 + $0x100] sm:$0xff]
  %v112 = vld [vmem:[%s3 + $0x108] sm:$0xff]
  %v113 = vld [vmem:[%s3 + $0x110] sm:$0xff]
  %v114 = vld [vmem:[%s3 + $0x118] sm:$0xff]
  %v115 = vld [vmem:[%s3 + $0x120] sm:$0xff]
  %v116 = vld [vmem:[%s3 + $0x128] sm:$0xff]
  %v117 = vld [vmem:[%s3 + $0x130] sm:$0xff]
  %v118 = vld [vmem:[%s3 + $0x138] sm:$0xff]
  %v119 = vld [vmem:[%s3 + $0x140] sm:$0xff]
  %v120 = vld [vmem:[%s3 + $0x148] sm:$0xff]
  %v121 = vld [vmem:[%s3 + $0x150] sm:$0xff]
  %v122 = vld [vmem:[%s3 + $0x158] sm:$0xff]
  %v123 = vld [vmem:[%s3 + $0x160] sm:$0xff]
  %v124 = vld [vmem:[%s3 + $0x168] sm:$0xff]
  %v125 = vld [vmem:[%s3 + $0x170] sm:$0xff]
  %v126 = vld [vmem:[%s3 + $0x178] sm:$0xff]
  %v127 = vld [vmem:[%s3 + $0x180] sm:$0xff]
  %v128 = vld [vmem:[%s3 + $0x188] sm:$0xff]
  %v129 = vld [vmem:[%s3 + $0x190] sm:$0xff]
  %v130 = vld [vmem:[%s3 + $0x198] sm:$0xff]
  %v131 = vld [vmem:[%s3 + $0x1a0] sm:$0xff]
  %v132 = vld [vmem:[%s3 + $0x1a8] sm:$0xff]
  %v133 = vld [vmem:[%s3 + $0x1b0] sm:$0xff]
  %v134 = vld [vmem:[%s3 + $0x1b8] sm:$0xff]
  %v135 = vld [vmem:[%s3 + $0x1c0] sm:$0xff]
  %v136 = vld [vmem:[%s3 + $0x1c8] sm:$0xff]
  %v137 = vld [vmem:[%s3 + $0x1d0] sm:$0xff]
  %v138 = vld [vmem:[%s3 + $0x1d8] sm:$0xff]
  %v139 = vld [vmem:[%s3 + $0x1e0] sm:$0xff]
  %v140 = vld [vmem:[%s3 + $0x1e8] sm:$0xff]
  %v141 = vld [vmem:[%s3 + $0x1f0] sm:$0xff]
  %v142 = vld [vmem:[%s3 + $0x1f8] sm:$0xff]
  %v143 = vld [vmem:[%s3 + $0x200] sm:$0xff]
  %v144 = vld [vmem:[%s3 + $0x208] sm:$0xff]
  %v145 = vld [vmem:[%s3 + $0x210] sm:$0xff]
  %v146 = vld [vmem:[%s3 + $0x218] sm:$0xff]
  %v147 = vld [vmem:[%s3 + $0x220] sm:$0xff]
  %v148 = vld [vmem:[%s3 + $0x228] sm:$0xff]
  %v149 = vld [vmem:[%s3 + $0x230] sm:$0xff]
  %v150 = vld [vmem:[%s3 + $0x238] sm:$0xff]
  %v151 = vld [vmem:[%s3 + $0x240] sm:$0xff]
  %v152 = vld [vmem:[%s3 + $0x248] sm:$0xff]
  %v153 = vld [vmem:[%s3 + $0x250] sm:$0xff]
  %v154 = vld [vmem:[%s3 + $0x258] sm:$0xff]
  %v155 = vld [vmem:[%s3 + $0x260] sm:$0xff]
  %v156 = vld [vmem:[%s3 + $0x268] sm:$0xff]
  %v157 = vld [vmem:[%s3 + $0x270] sm:$0xff]
  %v158 = vld [vmem:[%s3 + $0x278] sm:$0xff]
  %v159 = vld [vmem:[%s3 + $0x280] sm:$0xff]
  %v160 = vld [vmem:[%s3 + $0x288] sm:$0xff]
  %v161 = vld [vmem:[%s3 + $0x290] sm:$0xff]
  %v162 = vld [vmem:[%s3 + $0x298] sm:$0xff]
  %v163 = vld [vmem:[%s3 + $0x2a0] sm:$0xff]
  %v164 = vld [vmem:[%s3 + $0x2a8] sm:$0xff]
  %v165 = vld [vmem:[%s3 + $0x2b0] sm:$0xff]
  %v166 = vld [vmem:[%s3 + $0x2b8] sm:$0xff]
  %v167 = vld [vmem:[%s3 + $0x2c0] sm:$0xff]
  %v168 = vld [vmem:[%s3 + $0x2c8] sm:$0xff]
  %v169 = vld [vmem:[%s3 + $0x2d0] sm:$0xff]
  %v170 = vld [vmem:[%s3 + $0x2d8] sm:$0xff]
  %v171 = vld [vmem:[%s3 + $0x2e0] sm:$0xff]
  %v172 = vld [vmem:[%s3 + $0x2e8] sm:$0xff]
  %v173 = vld [vmem:[%s3 + $0x2f0] sm:$0xff]
  %v174 = vld [vmem:[%s3 + $0x2f8] sm:$0xff]
  %v175 = vld [vmem:[%s4] sm:$0xff]
  %177 = vset.pattern.permute.xlu0 0
  %178 = vperm.xlu0 %177, %v175
  %v179 = vpop.permute.xlu0 %178
  %v182 = vperm.slane %v51, 0
  %v183 = vperm.slane %v51, 1
  %v184 = vperm.slane %v51, 2
  %v185 = vperm.slane %v51, 3
  %v186 = vperm.slane %v51, 4
  %v187 = vperm.slane %v51, 5
  %v194 = vmul.f32 %v179, %v182
  %v195 = vmul.f32 %v179, %v183
  %v196 = vmul.f32 %v179, %v184
  %v197 = vmul.f32 %v179, %v185
  %v198 = vmul.f32 %v179, %v186
  %v199 = vmul.f32 %v179, %v187
  %200 = vmatpush.msra.mxu0 %v169
  %201 = vmatpush.msra.mxu0 %v163
  %202 = vmatpush.msra.mxu0 %v157
  %203 = vmatpush.msra.mxu0 %v151
  %204 = vmatpush.msra.mxu0 %v145
  %205 = vmatpush.msra.mxu0 %v139
  %206 = vmatpush.msra.mxu0 %v133
  %207 = vmatpush.msra.mxu0 %v127
  %208 = vmatpush.msra.mxu0 %v121
  %209 = vmatpush.msra.mxu0 %v115
  %210 = vmatpush.msra.mxu0 %v109
  %211 = vmatpush.msra.mxu0 %v103
  %212 = vmatpush.msra.mxu0 %v97
  %213 = vmatpush.msra.mxu0 %v91
  %214 = vmatpush.msra.mxu0 %v85
  %215 = vmatpush.msra.mxu0 %v79
  %216 = vmatmul.f32.gmra.mxu0 %v77
  %v217 = vpop.f32.mrf.mxu0
  %v218 = vadd.f32 %v194, %v217
  %219 = vdwg.mxu0
  %220 = vmatpush.msra.mxu0 %v170
  %221 = vmatpush.msra.mxu0 %v164
  %222 = vmatpush.msra.mxu0 %v158
  %223 = vmatpush.msra.mxu0 %v152
  %224 = vmatpush.msra.mxu0 %v146
  %225 = vmatpush.msra.mxu0 %v140
  %226 = vmatpush.msra.mxu0 %v134
  %227 = vmatpush.msra.mxu0 %v128
  %228 = vmatpush.msra.mxu0 %v122
  %229 = vmatpush.msra.mxu0 %v116
  %230 = vmatpush.msra.mxu0 %v110
  %231 = vmatpush.msra.mxu0 %v104
  %232 = vmatpush.msra.mxu0 %v98
  %233 = vmatpush.msra.mxu0 %v92
  %234 = vmatpush.msra.mxu0 %v86
  %235 = vmatpush.msra.mxu0 %v80
  %236 = vmatmul.f32.gmra.mxu0 %v77
  %v237 = vpop.f32.mrf.mxu0
  %v238 = vadd.f32 %v195, %v237
  %239 = vdwg.mxu0
  %240 = vmatpush.msra.mxu0 %v171
  %241 = vmatpush.msra.mxu0 %v165
  %242 = vmatpush.msra.mxu0 %v159
  %243 = vmatpush.msra.mxu0 %v153
  %244 = vmatpush.msra.mxu0 %v147
  %245 = vmatpush.msra.mxu0 %v141
  %246 = vmatpush.msra.mxu0 %v135
  %247 = vmatpush.msra.mxu0 %v129
  %248 = vmatpush.msra.mxu0 %v123
  %249 = vmatpush.msra.mxu0 %v117
  %250 = vmatpush.msra.mxu0 %v111
  %251 = vmatpush.msra.mxu0 %v105
  %252 = vmatpush.msra.mxu0 %v99
  %253 = vmatpush.msra.mxu0 %v93
  %254 = vmatpush.msra.mxu0 %v87
  %255 = vmatpush.msra.mxu0 %v81
  %256 = vmatmul.f32.gmra.mxu0 %v77
  %v257 = vpop.f32.mrf.mxu0
  %v258 = vadd.f32 %v196, %v257
  %259 = vdwg.mxu0
  %260 = vmatpush.msra.mxu0 %v172
  %261 = vmatpush.msra.mxu0 %v166
  %262 = vmatpush.msra.mxu0 %v160
  %263 = vmatpush.msra.mxu0 %v154
  %264 = vmatpush.msra.mxu0 %v148
  %265 = vmatpush.msra.mxu0 %v142
  %266 = vmatpush.msra.mxu0 %v136
  %267 = vmatpush.msra.mxu0 %v130
  %268 = vmatpush.msra.mxu0 %v124
  %269 = vmatpush.msra.mxu0 %v118
  %270 = vmatpush.msra.mxu0 %v112
  %271 = vmatpush.msra.mxu0 %v106
  %272 = vmatpush.msra.mxu0 %v100
  %273 = vmatpush.msra.mxu0 %v94
  %274 = vmatpush.msra.mxu0 %v88
  %275 = vmatpush.msra.mxu0 %v82
  %276 = vmatmul.f32.gmra.mxu0 %v77
  %v277 = vpop.f32.mrf.mxu0
  %v278 = vadd.f32 %v197, %v277
  %279 = vdwg.mxu0
  %280 = vmatpush.msra.mxu0 %v173
  %281 = vmatpush.msra.mxu0 %v167
  %282 = vmatpush.msra.mxu0 %v161
  %283 = vmatpush.msra.mxu0 %v155
  %284 = vmatpush.msra.mxu0 %v149
  %285 = vmatpush.msra.mxu0 %v143
  %286 = vmatpush.msra.mxu0 %v137
  %287 = vmatpush.msra.mxu0 %v131
  %288 = vmatpush.msra.mxu0 %v125
  %289 = vmatpush.msra.mxu0 %v119
  %290 = vmatpush.msra.mxu0 %v113
  %291 = vmatpush.msra.mxu0 %v107
  %292 = vmatpush.msra.mxu0 %v101
  %293 = vmatpush.msra.mxu0 %v95
  %294 = vmatpush.msra.mxu0 %v89
  %295 = vmatpush.msra.mxu0 %v83
  %296 = vmatmul.f32.gmra.mxu0 %v77
  %v297 = vpop.f32.mrf.mxu0
  %v298 = vadd.f32 %v198, %v297
  %299 = vdwg.mxu0
  %300 = vmatpush.msra.mxu0 %v174
  %301 = vmatpush.msra.mxu0 %v168
  %302 = vmatpush.msra.mxu0 %v162
  %303 = vmatpush.msra.mxu0 %v156
  %304 = vmatpush.msra.mxu0 %v150
  %305 = vmatpush.msra.mxu0 %v144
  %306 = vmatpush.msra.mxu0 %v138
  %307 = vmatpush.msra.mxu0 %v132
  %308 = vmatpush.msra.mxu0 %v126
  %309 = vmatpush.msra.mxu0 %v120
  %310 = vmatpush.msra.mxu0 %v114
  %311 = vmatpush.msra.mxu0 %v108
  %312 = vmatpush.msra.mxu0 %v102
  %313 = vmatpush.msra.mxu0 %v96
  %314 = vmatpush.msra.mxu0 %v90
  %315 = vmatpush.msra.mxu0 %v84
  %316 = vmatmul.f32.gmra.mxu0 %v77
  %v317 = vpop.f32.mrf.mxu0
  %v318 = vadd.f32 %v199, %v317
  %319 = vdwg.mxu0
  %v320 = vld [vmem:[%s1] sm:$0xff]
  %v321 = vld [vmem:[%s1 + $0x8] sm:$0xff]
  %v322 = vld [vmem:[%s1 + $0x10] sm:$0xff]
  %v323 = vld [vmem:[%s1 + $0x18] sm:$0xff]
  %v324 = vld [vmem:[%s1 + $0x20] sm:$0xff]
  %v325 = vld [vmem:[%s1 + $0x28] sm:$0xff]
  %338 = vrot.lane.b32.xlu0 %v218, 127
  %v339 = vpop.permute.xlu0 %338
  %340 = vrot.lane.b32.xlu0 %v238, 127
  %v341 = vpop.permute.xlu0 %340
  %342 = vrot.lane.b32.xlu0 %v258, 127
  %v343 = vpop.permute.xlu0 %342
  %344 = vrot.lane.b32.xlu0 %v278, 127
  %v345 = vpop.permute.xlu0 %344
  %346 = vrot.lane.b32.xlu0 %v298, 127
  %v347 = vpop.permute.xlu0 %346
  %348 = vrot.lane.b32.xlu0 %v318, 127
  %v349 = vpop.permute.xlu0 %348
  %350 = vrot.lane.b32.xlu0 %v320, 127
  %v351 = vpop.permute.xlu0 %350
  %352 = vrot.lane.b32.xlu0 %v321, 127
  %v353 = vpop.permute.xlu0 %352
  %354 = vrot.lane.b32.xlu0 %v322, 127
  %v355 = vpop.permute.xlu0 %354
  %356 = vrot.lane.b32.xlu0 %v323, 127
  %v357 = vpop.permute.xlu0 %356
  %358 = vrot.lane.b32.xlu0 %v324, 127
  %v359 = vpop.permute.xlu0 %358
  %360 = vrot.lane.b32.xlu0 %v325, 127
  %v361 = vpop.permute.xlu0 %360
  %vm362 = vcmask 1039360
  %v363 = vsel %vm362, %v339, %v341
  %v364 = vsel %vm362, %v341, %v343
  %v365 = vsel %vm362, %v343, %v345
  %v366 = vsel %vm362, %v345, %v347
  %v367 = vsel %vm362, %v347, %v349
  %v368 = vsel %vm362, %v351, %v353
  %v369 = vsel %vm362, %v353, %v355
  %v370 = vsel %vm362, %v355, %v357
  %v371 = vsel %vm362, %v357, %v359
  %v372 = vsel %vm362, %v359, %v361
  %385 = vrot.lane.b32.xlu0 %v218, 126
  %v386 = vpop.permute.xlu0 %385
  %387 = vrot.lane.b32.xlu0 %v238, 126
  %v388 = vpop.permute.xlu0 %387
  %389 = vrot.lane.b32.xlu0 %v258, 126
  %v390 = vpop.permute.xlu0 %389
  %391 = vrot.lane.b32.xlu0 %v278, 126
  %v392 = vpop.permute.xlu0 %391
  %393 = vrot.lane.b32.xlu0 %v298, 126
  %v394 = vpop.permute.xlu0 %393
  %395 = vrot.lane.b32.xlu0 %v318, 126
  %v396 = vpop.permute.xlu0 %395
  %397 = vrot.lane.b32.xlu0 %v320, 126
  %v398 = vpop.permute.xlu0 %397
  %399 = vrot.lane.b32.xlu0 %v321, 126
  %v400 = vpop.permute.xlu0 %399
  %401 = vrot.lane.b32.xlu0 %v322, 126
  %v402 = vpop.permute.xlu0 %401
  %403 = vrot.lane.b32.xlu0 %v323, 126
  %v404 = vpop.permute.xlu0 %403
  %405 = vrot.lane.b32.xlu0 %v324, 126
  %v406 = vpop.permute.xlu0 %405
  %407 = vrot.lane.b32.xlu0 %v325, 126
  %v408 = vpop.permute.xlu0 %407
  %vm409 = vcmask 1031168
  %v410 = vsel %vm409, %v386, %v388
  %v411 = vsel %vm409, %v388, %v390
  %v412 = vsel %vm409, %v390, %v392
  %v413 = vsel %vm409, %v392, %v394
  %v414 = vsel %vm409, %v394, %v396
  %v415 = vsel %vm409, %v398, %v400
  %v416 = vsel %vm409, %v400, %v402
  %v417 = vsel %vm409, %v402, %v404
  %v418 = vsel %vm409, %v404, %v406
  %v419 = vsel %vm409, %v406, %v408
  %432 = vrot.lane.b32.xlu0 %v218, 110
  %v433 = vpop.permute.xlu0 %432
  %434 = vrot.lane.b32.xlu0 %v238, 110
  %v435 = vpop.permute.xlu0 %434
  %436 = vrot.lane.b32.xlu0 %v258, 110
  %v437 = vpop.permute.xlu0 %436
  %438 = vrot.lane.b32.xlu0 %v278, 110
  %v439 = vpop.permute.xlu0 %438
  %440 = vrot.lane.b32.xlu0 %v298, 110
  %v441 = vpop.permute.xlu0 %440
  %442 = vrot.lane.b32.xlu0 %v318, 110
  %v443 = vpop.permute.xlu0 %442
  %444 = vrot.lane.b32.xlu0 %v320, 110
  %v445 = vpop.permute.xlu0 %444
  %446 = vrot.lane.b32.xlu0 %v321, 110
  %v447 = vpop.permute.xlu0 %446
  %448 = vrot.lane.b32.xlu0 %v322, 110
  %v449 = vpop.permute.xlu0 %448
  %450 = vrot.lane.b32.xlu0 %v323, 110
  %v451 = vpop.permute.xlu0 %450
  %452 = vrot.lane.b32.xlu0 %v324, 110
  %v453 = vpop.permute.xlu0 %452
  %454 = vrot.lane.b32.xlu0 %v325, 110
  %v455 = vpop.permute.xlu0 %454
  %vm456 = vcmask 900096
  %v457 = vsel %vm456, %v433, %v435
  %v458 = vsel %vm456, %v435, %v437
  %v459 = vsel %vm456, %v437, %v439
  %v460 = vsel %vm456, %v439, %v441
  %v461 = vsel %vm456, %v441, %v443
  %v462 = vsel %vm456, %v445, %v447
  %v463 = vsel %vm456, %v447, %v449
  %v464 = vsel %vm456, %v449, %v451
  %v465 = vsel %vm456, %v451, %v453
  %v466 = vsel %vm456, %v453, %v455
  %479 = vrot.lane.b32.xlu0 %v218, 109
  %v480 = vpop.permute.xlu0 %479
  %481 = vrot.lane.b32.xlu0 %v238, 109
  %v482 = vpop.permute.xlu0 %481
  %483 = vrot.lane.b32.xlu0 %v258, 109
  %v484 = vpop.permute.xlu0 %483
  %485 = vrot.lane.b32.xlu0 %v278, 109
  %v486 = vpop.permute.xlu0 %485
  %487 = vrot.lane.b32.xlu0 %v298, 109
  %v488 = vpop.permute.xlu0 %487
  %489 = vrot.lane.b32.xlu0 %v318, 109
  %v490 = vpop.permute.xlu0 %489
  %491 = vrot.lane.b32.xlu0 %v320, 109
  %v492 = vpop.permute.xlu0 %491
  %493 = vrot.lane.b32.xlu0 %v321, 109
  %v494 = vpop.permute.xlu0 %493
  %495 = vrot.lane.b32.xlu0 %v322, 109
  %v496 = vpop.permute.xlu0 %495
  %497 = vrot.lane.b32.xlu0 %v323, 109
  %v498 = vpop.permute.xlu0 %497
  %499 = vrot.lane.b32.xlu0 %v324, 109
  %v500 = vpop.permute.xlu0 %499
  %501 = vrot.lane.b32.xlu0 %v325, 109
  %v502 = vpop.permute.xlu0 %501
  %vm503 = vcmask 891904
  %v504 = vsel %vm503, %v480, %v482
  %v505 = vsel %vm503, %v482, %v484
  %v506 = vsel %vm503, %v484, %v486
  %v507 = vsel %vm503, %v486, %v488
  %v508 = vsel %vm503, %v488, %v490
  %v509 = vsel %vm503, %v492, %v494
  %v510 = vsel %vm503, %v494, %v496
  %v511 = vsel %vm503, %v496, %v498
  %v512 = vsel %vm503, %v498, %v500
  %v513 = vsel %vm503, %v500, %v502
  %526 = vrot.lane.b32.xlu0 %v218, 108
  %v527 = vpop.permute.xlu0 %526
  %528 = vrot.lane.b32.xlu0 %v238, 108
  %v529 = vpop.permute.xlu0 %528
  %530 = vrot.lane.b32.xlu0 %v258, 108
  %v531 = vpop.permute.xlu0 %530
  %532 = vrot.lane.b32.xlu0 %v278, 108
  %v533 = vpop.permute.xlu0 %532
  %534 = vrot.lane.b32.xlu0 %v298, 108
  %v535 = vpop.permute.xlu0 %534
  %536 = vrot.lane.b32.xlu0 %v318, 108
  %v537 = vpop.permute.xlu0 %536
  %538 = vrot.lane.b32.xlu0 %v320, 108
  %v539 = vpop.permute.xlu0 %538
  %540 = vrot.lane.b32.xlu0 %v321, 108
  %v541 = vpop.permute.xlu0 %540
  %542 = vrot.lane.b32.xlu0 %v322, 108
  %v543 = vpop.permute.xlu0 %542
  %544 = vrot.lane.b32.xlu0 %v323, 108
  %v545 = vpop.permute.xlu0 %544
  %546 = vrot.lane.b32.xlu0 %v324, 108
  %v547 = vpop.permute.xlu0 %546
  %548 = vrot.lane.b32.xlu0 %v325, 108
  %v549 = vpop.permute.xlu0 %548
  %vm550 = vcmask 883712
  %v551 = vsel %vm550, %v527, %v529
  %v552 = vsel %vm550, %v529, %v531
  %v553 = vsel %vm550, %v531, %v533
  %v554 = vsel %vm550, %v533, %v535
  %v555 = vsel %vm550, %v535, %v537
  %v556 = vsel %vm550, %v539, %v541
  %v557 = vsel %vm550, %v541, %v543
  %v558 = vsel %vm550, %v543, %v545
  %v559 = vsel %vm550, %v545, %v547
  %v560 = vsel %vm550, %v547, %v549
  %573 = vrot.lane.b32.xlu0 %v218, 92
  %v574 = vpop.permute.xlu0 %573
  %575 = vrot.lane.b32.xlu0 %v238, 92
  %v576 = vpop.permute.xlu0 %575
  %577 = vrot.lane.b32.xlu0 %v258, 92
  %v578 = vpop.permute.xlu0 %577
  %579 = vrot.lane.b32.xlu0 %v278, 92
  %v580 = vpop.permute.xlu0 %579
  %581 = vrot.lane.b32.xlu0 %v298, 92
  %v582 = vpop.permute.xlu0 %581
  %583 = vrot.lane.b32.xlu0 %v318, 92
  %v584 = vpop.permute.xlu0 %583
  %585 = vrot.lane.b32.xlu0 %v320, 92
  %v586 = vpop.permute.xlu0 %585
  %587 = vrot.lane.b32.xlu0 %v321, 92
  %v588 = vpop.permute.xlu0 %587
  %589 = vrot.lane.b32.xlu0 %v322, 92
  %v590 = vpop.permute.xlu0 %589
  %591 = vrot.lane.b32.xlu0 %v323, 92
  %v592 = vpop.permute.xlu0 %591
  %593 = vrot.lane.b32.xlu0 %v324, 92
  %v594 = vpop.permute.xlu0 %593
  %595 = vrot.lane.b32.xlu0 %v325, 92
  %v596 = vpop.permute.xlu0 %595
  %vm597 = vcmask 752640
  %v598 = vsel %vm597, %v574, %v576
  %v599 = vsel %vm597, %v576, %v578
  %v600 = vsel %vm597, %v578, %v580
  %v601 = vsel %vm597, %v580, %v582
  %v602 = vsel %vm597, %v582, %v584
  %v603 = vsel %vm597, %v586, %v588
  %v604 = vsel %vm597, %v588, %v590
  %v605 = vsel %vm597, %v590, %v592
  %v606 = vsel %vm597, %v592, %v594
  %v607 = vsel %vm597, %v594, %v596
  %620 = vrot.lane.b32.xlu0 %v218, 91
  %v621 = vpop.permute.xlu0 %620
  %622 = vrot.lane.b32.xlu0 %v238, 91
  %v623 = vpop.permute.xlu0 %622
  %624 = vrot.lane.b32.xlu0 %v258, 91
  %v625 = vpop.permute.xlu0 %624
  %626 = vrot.lane.b32.xlu0 %v278, 91
  %v627 = vpop.permute.xlu0 %626
  %628 = vrot.lane.b32.xlu0 %v298, 91
  %v629 = vpop.permute.xlu0 %628
  %630 = vrot.lane.b32.xlu0 %v318, 91
  %v631 = vpop.permute.xlu0 %630
  %632 = vrot.lane.b32.xlu0 %v320, 91
  %v633 = vpop.permute.xlu0 %632
  %634 = vrot.lane.b32.xlu0 %v321, 91
  %v635 = vpop.permute.xlu0 %634
  %636 = vrot.lane.b32.xlu0 %v322, 91
  %v637 = vpop.permute.xlu0 %636
  %638 = vrot.lane.b32.xlu0 %v323, 91
  %v639 = vpop.permute.xlu0 %638
  %640 = vrot.lane.b32.xlu0 %v324, 91
  %v641 = vpop.permute.xlu0 %640
  %642 = vrot.lane.b32.xlu0 %v325, 91
  %v643 = vpop.permute.xlu0 %642
  %vm644 = vcmask 744448
  %v645 = vsel %vm644, %v621, %v623
  %v646 = vsel %vm644, %v623, %v625
  %v647 = vsel %vm644, %v625, %v627
  %v648 = vsel %vm644, %v627, %v629
  %v649 = vsel %vm644, %v629, %v631
  %v650 = vsel %vm644, %v633, %v635
  %v651 = vsel %vm644, %v635, %v637
  %v652 = vsel %vm644, %v637, %v639
  %v653 = vsel %vm644, %v639, %v641
  %v654 = vsel %vm644, %v641, %v643
  %667 = vrot.lane.b32.xlu0 %v218, 90
  %v668 = vpop.permute.xlu0 %667
  %669 = vrot.lane.b32.xlu0 %v238, 90
  %v670 = vpop.permute.xlu0 %669
  %671 = vrot.lane.b32.xlu0 %v258, 90
  %v672 = vpop.permute.xlu0 %671
  %673 = vrot.lane.b32.xlu0 %v278, 90
  %v674 = vpop.permute.xlu0 %673
  %675 = vrot.lane.b32.xlu0 %v298, 90
  %v676 = vpop.permute.xlu0 %675
  %677 = vrot.lane.b32.xlu0 %v318, 90
  %v678 = vpop.permute.xlu0 %677
  %679 = vrot.lane.b32.xlu0 %v320, 90
  %v680 = vpop.permute.xlu0 %679
  %681 = vrot.lane.b32.xlu0 %v321, 90
  %v682 = vpop.permute.xlu0 %681
  %683 = vrot.lane.b32.xlu0 %v322, 90
  %v684 = vpop.permute.xlu0 %683
  %685 = vrot.lane.b32.xlu0 %v323, 90
  %v686 = vpop.permute.xlu0 %685
  %687 = vrot.lane.b32.xlu0 %v324, 90
  %v688 = vpop.permute.xlu0 %687
  %689 = vrot.lane.b32.xlu0 %v325, 90
  %v690 = vpop.permute.xlu0 %689
  %vm691 = vcmask 736256
  %v692 = vsel %vm691, %v668, %v670
  %v693 = vsel %vm691, %v670, %v672
  %v694 = vsel %vm691, %v672, %v674
  %v695 = vsel %vm691, %v674, %v676
  %v696 = vsel %vm691, %v676, %v678
  %v697 = vsel %vm691, %v680, %v682
  %v698 = vsel %vm691, %v682, %v684
  %v699 = vsel %vm691, %v684, %v686
  %v700 = vsel %vm691, %v686, %v688
  %v701 = vsel %vm691, %v688, %v690
  %v714 = vld [vmem:[%s5] sm:$0xff]
  %v715 = vpack.c.bf16 %v320, %v218
  %v716 = vpack.c.bf16 %v321, %v238
  %v717 = vpack.c.bf16 %v322, %v258
  %v718 = vpack.c.bf16 %v323, %v278
  %v719 = vpack.c.bf16 %v324, %v298
  %v720 = vpack.c.bf16 %v325, %v318
  %v721 = vpack.c.bf16 %v368, %v363
  %v722 = vpack.c.bf16 %v369, %v364
  %v723 = vpack.c.bf16 %v370, %v365
  %v724 = vpack.c.bf16 %v371, %v366
  %v725 = vpack.c.bf16 %v372, %v367
  %v726 = vpack.c.bf16 %v361, %v349
  %v727 = vpack.c.bf16 %v415, %v410
  %v728 = vpack.c.bf16 %v416, %v411
  %v729 = vpack.c.bf16 %v417, %v412
  %v730 = vpack.c.bf16 %v418, %v413
  %v731 = vpack.c.bf16 %v419, %v414
  %v732 = vpack.c.bf16 %v408, %v396
  %v733 = vpack.c.bf16 %v462, %v457
  %v734 = vpack.c.bf16 %v463, %v458
  %v735 = vpack.c.bf16 %v464, %v459
  %v736 = vpack.c.bf16 %v465, %v460
  %v737 = vpack.c.bf16 %v466, %v461
  %v738 = vpack.c.bf16 %v455, %v443
  %v739 = vpack.c.bf16 %v509, %v504
  %v740 = vpack.c.bf16 %v510, %v505
  %v741 = vpack.c.bf16 %v511, %v506
  %v742 = vpack.c.bf16 %v512, %v507
  %v743 = vpack.c.bf16 %v513, %v508
  %v744 = vpack.c.bf16 %v502, %v490
  %v745 = vpack.c.bf16 %v556, %v551
  %v746 = vpack.c.bf16 %v557, %v552
  %v747 = vpack.c.bf16 %v558, %v553
  %v748 = vpack.c.bf16 %v559, %v554
  %v749 = vpack.c.bf16 %v560, %v555
  %v750 = vpack.c.bf16 %v549, %v537
  %v751 = vpack.c.bf16 %v603, %v598
  %v752 = vpack.c.bf16 %v604, %v599
  %v753 = vpack.c.bf16 %v605, %v600
  %v754 = vpack.c.bf16 %v606, %v601
  %v755 = vpack.c.bf16 %v607, %v602
  %v756 = vpack.c.bf16 %v596, %v584
  %v757 = vpack.c.bf16 %v650, %v645
  %v758 = vpack.c.bf16 %v651, %v646
  %v759 = vpack.c.bf16 %v652, %v647
  %v760 = vpack.c.bf16 %v653, %v648
  %v761 = vpack.c.bf16 %v654, %v649
  %v762 = vpack.c.bf16 %v643, %v631
  %v763 = vpack.c.bf16 %v697, %v692
  %v764 = vpack.c.bf16 %v698, %v693
  %v765 = vpack.c.bf16 %v699, %v694
  %v766 = vpack.c.bf16 %v700, %v695
  %v767 = vpack.c.bf16 %v701, %v696
  %v768 = vpack.c.bf16 %v690, %v678
  %v769 = vld [vmem:[%s6] sm:$0xff]
  %771 = vset.pattern.permute.xlu0 0
  %772 = vperm.xlu0 %771, %v769
  %v773 = vpop.permute.xlu0 %772
  %v776 = vunpack.c.l.b16 %v714
  %v777 = vunpack.c.h.b16 %v714
  %v778 = vpack.c.b16 %v776, %v776
  %v779 = vpack.c.b16 %v777, %v777
  %vm781 = vcmask 130048
  %v783 = vsel %vm781, %v779, 0
  %785 = vmatpush.bf16.msra.mxu0 %v757
  %786 = vmatpush.bf16.msra.mxu0 %v751
  %787 = vmatpush.bf16.msra.mxu0 %v745
  %788 = vmatpush.bf16.msra.mxu0 %v739
  %789 = vmatpush.bf16.msra.mxu0 %v733
  %790 = vmatpush.bf16.msra.mxu0 %v727
  %791 = vmatpush.bf16.msra.mxu0 %v721
  %792 = vmatpush.bf16.msra.mxu0 %v715
  %793 = vmatmul.bf16.gmra.mxu0 %v778
  %v794 = vpop.f32.mrf.mxu0
  %v795 = vadd.f32 %v773, %v794
  %v796 = vpop.f32.mrf.mxu0
  %797 = vdwg.mxu0
  %798 = vmatpush.bf16.msra.mxu0 0
  %799 = vmatpush.bf16.msra.mxu0 0
  %800 = vmatpush.bf16.msra.mxu0 0
  %801 = vmatpush.bf16.msra.mxu0 0
  %802 = vmatpush.bf16.msra.mxu0 0
  %803 = vmatpush.bf16.msra.mxu0 0
  %804 = vmatpush.bf16.msra.mxu0 0
  %805 = vmatpush.bf16.msra.mxu0 %v763
  %806 = vmatmul.bf16.gmra.mxu0 %v783
  %v807 = vpop.f32.mrf.mxu0
  %v808 = vadd.f32 %v795, %v807
  %v809 = vpop.f32.mrf.mxu0
  %810 = vdwg.mxu0
  %811 = vmatpush.bf16.msra.mxu0 %v758
  %812 = vmatpush.bf16.msra.mxu0 %v752
  %813 = vmatpush.bf16.msra.mxu0 %v746
  %814 = vmatpush.bf16.msra.mxu0 %v740
  %815 = vmatpush.bf16.msra.mxu0 %v734
  %816 = vmatpush.bf16.msra.mxu0 %v728
  %817 = vmatpush.bf16.msra.mxu0 %v722
  %818 = vmatpush.bf16.msra.mxu0 %v716
  %819 = vmatmul.bf16.gmra.mxu0 %v778
  %v820 = vpop.f32.mrf.mxu0
  %v821 = vadd.f32 %v773, %v820
  %v822 = vpop.f32.mrf.mxu0
  %823 = vdwg.mxu0
  %824 = vmatpush.bf16.msra.mxu0 0
  %825 = vmatpush.bf16.msra.mxu0 0
  %826 = vmatpush.bf16.msra.mxu0 0
  %827 = vmatpush.bf16.msra.mxu0 0
  %828 = vmatpush.bf16.msra.mxu0 0
  %829 = vmatpush.bf16.msra.mxu0 0
  %830 = vmatpush.bf16.msra.mxu0 0
  %831 = vmatpush.bf16.msra.mxu0 %v764
  %832 = vmatmul.bf16.gmra.mxu0 %v783
  %v833 = vpop.f32.mrf.mxu0
  %v834 = vadd.f32 %v821, %v833
  %v835 = vpop.f32.mrf.mxu0
  %836 = vdwg.mxu0
  %837 = vmatpush.bf16.msra.mxu0 %v759
  %838 = vmatpush.bf16.msra.mxu0 %v753
  %839 = vmatpush.bf16.msra.mxu0 %v747
  %840 = vmatpush.bf16.msra.mxu0 %v741
  %841 = vmatpush.bf16.msra.mxu0 %v735
  %842 = vmatpush.bf16.msra.mxu0 %v729
  %843 = vmatpush.bf16.msra.mxu0 %v723
  %844 = vmatpush.bf16.msra.mxu0 %v717
  %845 = vmatmul.bf16.gmra.mxu0 %v778
  %v846 = vpop.f32.mrf.mxu0
  %v847 = vadd.f32 %v773, %v846
  %v848 = vpop.f32.mrf.mxu0
  %849 = vdwg.mxu0
  %850 = vmatpush.bf16.msra.mxu0 0
  %851 = vmatpush.bf16.msra.mxu0 0
  %852 = vmatpush.bf16.msra.mxu0 0
  %853 = vmatpush.bf16.msra.mxu0 0
  %854 = vmatpush.bf16.msra.mxu0 0
  %855 = vmatpush.bf16.msra.mxu0 0
  %856 = vmatpush.bf16.msra.mxu0 0
  %857 = vmatpush.bf16.msra.mxu0 %v765
  %858 = vmatmul.bf16.gmra.mxu0 %v783
  %v859 = vpop.f32.mrf.mxu0
  %v860 = vadd.f32 %v847, %v859
  %v861 = vpop.f32.mrf.mxu0
  %862 = vdwg.mxu0
  %863 = vmatpush.bf16.msra.mxu0 %v760
  %864 = vmatpush.bf16.msra.mxu0 %v754
  %865 = vmatpush.bf16.msra.mxu0 %v748
  %866 = vmatpush.bf16.msra.mxu0 %v742
  %867 = vmatpush.bf16.msra.mxu0 %v736
  %868 = vmatpush.bf16.msra.mxu0 %v730
  %869 = vmatpush.bf16.msra.mxu0 %v724
  %870 = vmatpush.bf16.msra.mxu0 %v718
  %871 = vmatmul.bf16.gmra.mxu0 %v778
  %v872 = vpop.f32.mrf.mxu0
  %v873 = vadd.f32 %v773, %v872
  %v874 = vpop.f32.mrf.mxu0
  %875 = vdwg.mxu0
  %876 = vmatpush.bf16.msra.mxu0 0
  %877 = vmatpush.bf16.msra.mxu0 0
  %878 = vmatpush.bf16.msra.mxu0 0
  %879 = vmatpush.bf16.msra.mxu0 0
  %880 = vmatpush.bf16.msra.mxu0 0
  %881 = vmatpush.bf16.msra.mxu0 0
  %882 = vmatpush.bf16.msra.mxu0 0
  %883 = vmatpush.bf16.msra.mxu0 %v766
  %884 = vmatmul.bf16.gmra.mxu0 %v783
  %v885 = vpop.f32.mrf.mxu0
  %v886 = vadd.f32 %v873, %v885
  %v887 = vpop.f32.mrf.mxu0
  %888 = vdwg.mxu0
  %889 = vmatpush.bf16.msra.mxu0 %v761
  %890 = vmatpush.bf16.msra.mxu0 %v755
  %891 = vmatpush.bf16.msra.mxu0 %v749
  %892 = vmatpush.bf16.msra.mxu0 %v743
  %893 = vmatpush.bf16.msra.mxu0 %v737
  %894 = vmatpush.bf16.msra.mxu0 %v731
  %895 = vmatpush.bf16.msra.mxu0 %v725
  %896 = vmatpush.bf16.msra.mxu0 %v719
  %897 = vmatmul.bf16.gmra.mxu0 %v778
  %v898 = vpop.f32.mrf.mxu0
  %v899 = vadd.f32 %v773, %v898
  %v900 = vpop.f32.mrf.mxu0
  %901 = vdwg.mxu0
  %902 = vmatpush.bf16.msra.mxu0 0
  %903 = vmatpush.bf16.msra.mxu0 0
  %904 = vmatpush.bf16.msra.mxu0 0
  %905 = vmatpush.bf16.msra.mxu0 0
  %906 = vmatpush.bf16.msra.mxu0 0
  %907 = vmatpush.bf16.msra.mxu0 0
  %908 = vmatpush.bf16.msra.mxu0 0
  %909 = vmatpush.bf16.msra.mxu0 %v767
  %910 = vmatmul.bf16.gmra.mxu0 %v783
  %v911 = vpop.f32.mrf.mxu0
  %v912 = vadd.f32 %v899, %v911
  %v913 = vpop.f32.mrf.mxu0
  %914 = vdwg.mxu0
  %915 = vmatpush.bf16.msra.mxu0 %v762
  %916 = vmatpush.bf16.msra.mxu0 %v756
  %917 = vmatpush.bf16.msra.mxu0 %v750
  %918 = vmatpush.bf16.msra.mxu0 %v744
  %919 = vmatpush.bf16.msra.mxu0 %v738
  %920 = vmatpush.bf16.msra.mxu0 %v732
  %921 = vmatpush.bf16.msra.mxu0 %v726
  %922 = vmatpush.bf16.msra.mxu0 %v720
  %923 = vmatmul.bf16.gmra.mxu0 %v778
  %v924 = vpop.f32.mrf.mxu0
  %v925 = vadd.f32 %v773, %v924
  %v926 = vpop.f32.mrf.mxu0
  %927 = vdwg.mxu0
  %928 = vmatpush.bf16.msra.mxu0 0
  %929 = vmatpush.bf16.msra.mxu0 0
  %930 = vmatpush.bf16.msra.mxu0 0
  %931 = vmatpush.bf16.msra.mxu0 0
  %932 = vmatpush.bf16.msra.mxu0 0
  %933 = vmatpush.bf16.msra.mxu0 0
  %934 = vmatpush.bf16.msra.mxu0 0
  %935 = vmatpush.bf16.msra.mxu0 %v768
  %936 = vmatmul.bf16.gmra.mxu0 %v783
  %v937 = vpop.f32.mrf.mxu0
  %v938 = vadd.f32 %v925, %v937
  %v939 = vpop.f32.mrf.mxu0
  %940 = vdwg.mxu0
  %v941 = vmax.f32 %v808, 0.0
  %v942 = vmax.f32 %v834, 0.0
  %v943 = vmax.f32 %v860, 0.0
  %v944 = vmax.f32 %v886, 0.0
  %v945 = vmax.f32 %v912, 0.0
  %v946 = vmax.f32 %v938, 0.0
  %v948 = vperm.slane %v52, 0
  %v949 = vperm.slane %v52, 1
  %v950 = vperm.slane %v52, 2
  %v951 = vperm.slane %v52, 3
  %v952 = vperm.slane %v52, 4
  %v953 = vperm.slane %v52, 5
  %v960 = vmul.f32 %v941, %v948
  %v961 = vmul.f32 %v942, %v949
  %v962 = vmul.f32 %v943, %v950
  %v963 = vmul.f32 %v944, %v951
  %v964 = vmul.f32 %v945, %v952
  %v965 = vmul.f32 %v946, %v953
  %v966 = vadd.f32 %v960, %v961
  %v967 = vadd.f32 %v966, %v962
  %v968 = vadd.f32 %v967, %v963
  %v969 = vadd.f32 %v968, %v964
  %v970 = vsel %vm55, %v965, 0.0
  %v971 = vadd.f32 %v969, %v970
  %972 = vadd.xlane.f32.xlu0 %v971
  %v973 = vpop.xlane.xlu0 %972
  %v974 = vmul.f32 %v973, 0.001953125
  %v975 = vsub.f32 %v960, %v974
  %v976 = vsub.f32 %v961, %v974
  %v977 = vsub.f32 %v962, %v974
  %v978 = vsub.f32 %v963, %v974
  %v979 = vsub.f32 %v964, %v974
  %v980 = vsub.f32 %v965, %v974
  %v981 = vmul.f32 %v975, %v948
  %v982 = vmul.f32 %v976, %v949
  %v983 = vmul.f32 %v977, %v950
  %v984 = vmul.f32 %v978, %v951
  %v985 = vmul.f32 %v979, %v952
  %v986 = vmul.f32 %v980, %v953
  %v987 = vmul.f32 %v981, %v981
  %v988 = vmul.f32 %v982, %v982
  %v989 = vmul.f32 %v983, %v983
  %v990 = vmul.f32 %v984, %v984
  %v991 = vmul.f32 %v985, %v985
  %v992 = vmul.f32 %v986, %v986
  %v993 = vadd.f32 %v987, %v988
  %v994 = vadd.f32 %v993, %v989
  %v995 = vadd.f32 %v994, %v990
  %v996 = vadd.f32 %v995, %v991
  %v997 = vsel %vm55, %v992, 0.0
  %v998 = vadd.f32 %v996, %v997
  %999 = vadd.xlane.f32.xlu0 %v998
  %v1000 = vpop.xlane.xlu0 %999
  %v1001 = vmul.f32 %v1000, 0.001953125
  %v1002 = vld [vmem:[%s7] sm:$0xff]
  %v1003 = vadd.f32 %v1001, 1e-05
  %v1004 = vrsqrt.pop %v1003
  %v1005 = vmul.f32 %v1004, %v1003
  %v1006 = vmul.f32 %v1005, %v1004
  %v1007 = vmul.f32 0.5, %v1006
  %v1008 = vsub.f32 1.5, %v1007
  %v1009 = vmul.f32 %v1004, %v1008
  %vm1010 = vweird.f32 %v1003
  %vm1011 = vweird.f32 %v1004
  %vm1012 = vmor %vm1010, %vm1011
  %v1013 = vsel %vm1012, %v1004, %v1009
  %v1014 = vmul.f32 %v1002, %v1013
  %1016 = vset.pattern.permute.xlu0 0
  %1017 = vperm.xlu0 %1016, %v1014
  %v1018 = vpop.permute.xlu0 %1017
  %v1020 = vmul.f32 %v981, %v1018
  %v1021 = vmul.f32 %v982, %v1018
  %v1022 = vmul.f32 %v983, %v1018
  %v1023 = vmul.f32 %v984, %v1018
  %v1024 = vmul.f32 %v985, %v1018
  %v1025 = vmul.f32 %v986, %v1018
  %v1026 = vld [vmem:[%s8] sm:$0xff]
  %1028 = vset.pattern.permute.xlu0 0
  %1029 = vperm.xlu0 %1028, %v1026
  %v1030 = vpop.permute.xlu0 %1029
  %v1032 = vadd.f32 %v1020, %v1030
  %v1033 = vadd.f32 %v1021, %v1030
  %v1034 = vadd.f32 %v1022, %v1030
  %v1035 = vadd.f32 %v1023, %v1030
  %v1036 = vadd.f32 %v1024, %v1030
  %v1037 = vadd.f32 %v1025, %v1030
  %v1038 = vmul.f32 %v1032, %v948
  %v1039 = vmul.f32 %v1033, %v949
  %v1040 = vmul.f32 %v1034, %v950
  %v1041 = vmul.f32 %v1035, %v951
  %v1042 = vmul.f32 %v1036, %v952
  %v1043 = vmul.f32 %v1037, %v953
  %1050 = vrot.lane.b32.xlu0 %v1038, 19
  %v1051 = vpop.permute.xlu0 %1050
  %1052 = vrot.lane.b32.xlu0 %v1039, 19
  %v1053 = vpop.permute.xlu0 %1052
  %1054 = vrot.lane.b32.xlu0 %v1040, 19
  %v1055 = vpop.permute.xlu0 %1054
  %1056 = vrot.lane.b32.xlu0 %v1041, 19
  %v1057 = vpop.permute.xlu0 %1056
  %1058 = vrot.lane.b32.xlu0 %v1042, 19
  %v1059 = vpop.permute.xlu0 %1058
  %1060 = vrot.lane.b32.xlu0 %v1043, 19
  %v1061 = vpop.permute.xlu0 %1060
  %vm1062 = vcmask 154624
  %v1063 = vsel %vm1062, %v1051, %v1053
  %v1064 = vsel %vm1062, %v1053, %v1055
  %v1065 = vsel %vm1062, %v1055, %v1057
  %v1066 = vsel %vm1062, %v1057, %v1059
  %v1067 = vsel %vm1062, %v1059, %v1061
  %v1074 = vsel %vm1062, 0.0, %v1051
  %vm1075 = vcmask 220160
  %v1076 = vsel %vm1075, %v1067, 0.0
  %1079 = vrot.lane.b32.xlu0 %v1074, 127
  %v1080 = vpop.permute.xlu0 %1079
  %1081 = vrot.lane.b32.xlu0 %v1063, 127
  %v1082 = vpop.permute.xlu0 %1081
  %1083 = vrot.lane.b32.xlu0 %v1064, 127
  %v1084 = vpop.permute.xlu0 %1083
  %1085 = vrot.lane.b32.xlu0 %v1065, 127
  %v1086 = vpop.permute.xlu0 %1085
  %1087 = vrot.lane.b32.xlu0 %v1066, 127
  %v1088 = vpop.permute.xlu0 %1087
  %1089 = vrot.lane.b32.xlu0 %v1076, 127
  %v1090 = vpop.permute.xlu0 %1089
  %v1091 = vsel %vm362, %v1080, %v1082
  %v1092 = vsel %vm362, %v1082, %v1084
  %v1093 = vsel %vm362, %v1084, %v1086
  %v1094 = vsel %vm362, %v1086, %v1088
  %v1095 = vsel %vm362, %v1088, %v1090
  %1102 = vrot.lane.b32.xlu0 %v1074, 126
  %v1103 = vpop.permute.xlu0 %1102
  %1104 = vrot.lane.b32.xlu0 %v1063, 126
  %v1105 = vpop.permute.xlu0 %1104
  %1106 = vrot.lane.b32.xlu0 %v1064, 126
  %v1107 = vpop.permute.xlu0 %1106
  %1108 = vrot.lane.b32.xlu0 %v1065, 126
  %v1109 = vpop.permute.xlu0 %1108
  %1110 = vrot.lane.b32.xlu0 %v1066, 126
  %v1111 = vpop.permute.xlu0 %1110
  %1112 = vrot.lane.b32.xlu0 %v1076, 126
  %v1113 = vpop.permute.xlu0 %1112
  %v1114 = vsel %vm409, %v1103, %v1105
  %v1115 = vsel %vm409, %v1105, %v1107
  %v1116 = vsel %vm409, %v1107, %v1109
  %v1117 = vsel %vm409, %v1109, %v1111
  %v1118 = vsel %vm409, %v1111, %v1113
  %1125 = vrot.lane.b32.xlu0 %v1074, 110
  %v1126 = vpop.permute.xlu0 %1125
  %1127 = vrot.lane.b32.xlu0 %v1063, 110
  %v1128 = vpop.permute.xlu0 %1127
  %1129 = vrot.lane.b32.xlu0 %v1064, 110
  %v1130 = vpop.permute.xlu0 %1129
  %1131 = vrot.lane.b32.xlu0 %v1065, 110
  %v1132 = vpop.permute.xlu0 %1131
  %1133 = vrot.lane.b32.xlu0 %v1066, 110
  %v1134 = vpop.permute.xlu0 %1133
  %1135 = vrot.lane.b32.xlu0 %v1076, 110
  %v1136 = vpop.permute.xlu0 %1135
  %v1137 = vsel %vm456, %v1126, %v1128
  %v1138 = vsel %vm456, %v1128, %v1130
  %v1139 = vsel %vm456, %v1130, %v1132
  %v1140 = vsel %vm456, %v1132, %v1134
  %v1141 = vsel %vm456, %v1134, %v1136
  %1148 = vrot.lane.b32.xlu0 %v1074, 109
  %v1149 = vpop.permute.xlu0 %1148
  %1150 = vrot.lane.b32.xlu0 %v1063, 109
  %v1151 = vpop.permute.xlu0 %1150
  %1152 = vrot.lane.b32.xlu0 %v1064, 109
  %v1153 = vpop.permute.xlu0 %1152
  %1154 = vrot.lane.b32.xlu0 %v1065, 109
  %v1155 = vpop.permute.xlu0 %1154
  %1156 = vrot.lane.b32.xlu0 %v1066, 109
  %v1157 = vpop.permute.xlu0 %1156
  %1158 = vrot.lane.b32.xlu0 %v1076, 109
  %v1159 = vpop.permute.xlu0 %1158
  %v1160 = vsel %vm503, %v1149, %v1151
  %v1161 = vsel %vm503, %v1151, %v1153
  %v1162 = vsel %vm503, %v1153, %v1155
  %v1163 = vsel %vm503, %v1155, %v1157
  %v1164 = vsel %vm503, %v1157, %v1159
  %1171 = vrot.lane.b32.xlu0 %v1074, 108
  %v1172 = vpop.permute.xlu0 %1171
  %1173 = vrot.lane.b32.xlu0 %v1063, 108
  %v1174 = vpop.permute.xlu0 %1173
  %1175 = vrot.lane.b32.xlu0 %v1064, 108
  %v1176 = vpop.permute.xlu0 %1175
  %1177 = vrot.lane.b32.xlu0 %v1065, 108
  %v1178 = vpop.permute.xlu0 %1177
  %1179 = vrot.lane.b32.xlu0 %v1066, 108
  %v1180 = vpop.permute.xlu0 %1179
  %1181 = vrot.lane.b32.xlu0 %v1076, 108
  %v1182 = vpop.permute.xlu0 %1181
  %v1183 = vsel %vm550, %v1172, %v1174
  %v1184 = vsel %vm550, %v1174, %v1176
  %v1185 = vsel %vm550, %v1176, %v1178
  %v1186 = vsel %vm550, %v1178, %v1180
  %v1187 = vsel %vm550, %v1180, %v1182
  %1194 = vrot.lane.b32.xlu0 %v1074, 92
  %v1195 = vpop.permute.xlu0 %1194
  %1196 = vrot.lane.b32.xlu0 %v1063, 92
  %v1197 = vpop.permute.xlu0 %1196
  %1198 = vrot.lane.b32.xlu0 %v1064, 92
  %v1199 = vpop.permute.xlu0 %1198
  %1200 = vrot.lane.b32.xlu0 %v1065, 92
  %v1201 = vpop.permute.xlu0 %1200
  %1202 = vrot.lane.b32.xlu0 %v1066, 92
  %v1203 = vpop.permute.xlu0 %1202
  %1204 = vrot.lane.b32.xlu0 %v1076, 92
  %v1205 = vpop.permute.xlu0 %1204
  %v1206 = vsel %vm597, %v1195, %v1197
  %v1207 = vsel %vm597, %v1197, %v1199
  %v1208 = vsel %vm597, %v1199, %v1201
  %v1209 = vsel %vm597, %v1201, %v1203
  %v1210 = vsel %vm597, %v1203, %v1205
  %1217 = vrot.lane.b32.xlu0 %v1074, 91
  %v1218 = vpop.permute.xlu0 %1217
  %1219 = vrot.lane.b32.xlu0 %v1063, 91
  %v1220 = vpop.permute.xlu0 %1219
  %1221 = vrot.lane.b32.xlu0 %v1064, 91
  %v1222 = vpop.permute.xlu0 %1221
  %1223 = vrot.lane.b32.xlu0 %v1065, 91
  %v1224 = vpop.permute.xlu0 %1223
  %1225 = vrot.lane.b32.xlu0 %v1066, 91
  %v1226 = vpop.permute.xlu0 %1225
  %1227 = vrot.lane.b32.xlu0 %v1076, 91
  %v1228 = vpop.permute.xlu0 %1227
  %v1229 = vsel %vm644, %v1218, %v1220
  %v1230 = vsel %vm644, %v1220, %v1222
  %v1231 = vsel %vm644, %v1222, %v1224
  %v1232 = vsel %vm644, %v1224, %v1226
  %v1233 = vsel %vm644, %v1226, %v1228
  %1240 = vrot.lane.b32.xlu0 %v1074, 90
  %v1241 = vpop.permute.xlu0 %1240
  %1242 = vrot.lane.b32.xlu0 %v1063, 90
  %v1243 = vpop.permute.xlu0 %1242
  %1244 = vrot.lane.b32.xlu0 %v1064, 90
  %v1245 = vpop.permute.xlu0 %1244
  %1246 = vrot.lane.b32.xlu0 %v1065, 90
  %v1247 = vpop.permute.xlu0 %1246
  %1248 = vrot.lane.b32.xlu0 %v1066, 90
  %v1249 = vpop.permute.xlu0 %1248
  %1250 = vrot.lane.b32.xlu0 %v1076, 90
  %v1251 = vpop.permute.xlu0 %1250
  %v1252 = vsel %vm691, %v1241, %v1243
  %v1253 = vsel %vm691, %v1243, %v1245
  %v1254 = vsel %vm691, %v1245, %v1247
  %v1255 = vsel %vm691, %v1247, %v1249
  %v1256 = vsel %vm691, %v1249, %v1251
  %v1263 = vld [vmem:[%s9] sm:$0xf]
  %v1264 = vpack.c.bf16 %v1091, %v1074
  %v1265 = vpack.c.bf16 %v1092, %v1063
  %v1266 = vpack.c.bf16 %v1093, %v1064
  %v1267 = vpack.c.bf16 %v1094, %v1065
  %v1268 = vpack.c.bf16 %v1095, %v1066
  %v1269 = vpack.c.bf16 %v1090, %v1076
  %v1270 = vpack.c.bf16 %v1137, %v1114
  %v1271 = vpack.c.bf16 %v1138, %v1115
  %v1272 = vpack.c.bf16 %v1139, %v1116
  %v1273 = vpack.c.bf16 %v1140, %v1117
  %v1274 = vpack.c.bf16 %v1141, %v1118
  %v1275 = vpack.c.bf16 %v1136, %v1113
  %v1276 = vpack.c.bf16 %v1183, %v1160
  %v1277 = vpack.c.bf16 %v1184, %v1161
  %v1278 = vpack.c.bf16 %v1185, %v1162
  %v1279 = vpack.c.bf16 %v1186, %v1163
  %v1280 = vpack.c.bf16 %v1187, %v1164
  %v1281 = vpack.c.bf16 %v1182, %v1159
  %v1282 = vpack.c.bf16 %v1229, %v1206
  %v1283 = vpack.c.bf16 %v1230, %v1207
  %v1284 = vpack.c.bf16 %v1231, %v1208
  %v1285 = vpack.c.bf16 %v1232, %v1209
  %v1286 = vpack.c.bf16 %v1233, %v1210
  %v1287 = vpack.c.bf16 %v1228, %v1205
  %v1288 = vpack.c.bf16 %v1252, %v1252
  %v1289 = vpack.c.bf16 %v1253, %v1253
  %v1290 = vpack.c.bf16 %v1254, %v1254
  %v1291 = vpack.c.bf16 %v1255, %v1255
  %v1292 = vpack.c.bf16 %v1256, %v1256
  %v1293 = vpack.c.bf16 %v1251, %v1251
  %v1294 = vld [vmem:[%s10] sm:$0xff]
  %1296 = vset.pattern.permute.xlu0 0
  %1297 = vperm.xlu0 %1296, %v1294
  %v1298 = vpop.permute.xlu0 %1297
  %vm1300 = vcmask 588800
  %v1302 = vsel %vm1300, %v1263, 0
  %vm1304 = vcmask 1043456
  %v1306 = vsel %vm1304, %v1288, 0
  %v1309 = vsel %vm1304, %v1289, 0
  %v1312 = vsel %vm1304, %v1290, 0
  %v1315 = vsel %vm1304, %v1291, 0
  %v1318 = vsel %vm1304, %v1292, 0
  %v1321 = vsel %vm1304, %v1293, 0
  %1323 = vmatpush.bf16.msra.mxu0 0
  %1324 = vmatpush.bf16.msra.mxu0 0
  %1325 = vmatpush.bf16.msra.mxu0 0
  %1326 = vmatpush.bf16.msra.mxu0 %v1306
  %1327 = vmatpush.bf16.msra.mxu0 %v1282
  %1328 = vmatpush.bf16.msra.mxu0 %v1276
  %1329 = vmatpush.bf16.msra.mxu0 %v1270
  %1330 = vmatpush.bf16.msra.mxu0 %v1264
  %1331 = vmatmul.bf16.gmra.mxu0 %v1302
  %v1332 = vpop.f32.mrf.mxu0
  %v1333 = vadd.f32 %v1298, %v1332
  %v1334 = vpop.f32.mrf.mxu0
  %1335 = vdwg.mxu0
  %1336 = vmatpush.bf16.msra.mxu0 0
  %1337 = vmatpush.bf16.msra.mxu0 0
  %1338 = vmatpush.bf16.msra.mxu0 0
  %1339 = vmatpush.bf16.msra.mxu0 %v1309
  %1340 = vmatpush.bf16.msra.mxu0 %v1283
  %1341 = vmatpush.bf16.msra.mxu0 %v1277
  %1342 = vmatpush.bf16.msra.mxu0 %v1271
  %1343 = vmatpush.bf16.msra.mxu0 %v1265
  %1344 = vmatmul.bf16.gmra.mxu0 %v1302
  %v1345 = vpop.f32.mrf.mxu0
  %v1346 = vadd.f32 %v1298, %v1345
  %v1347 = vpop.f32.mrf.mxu0
  %1348 = vdwg.mxu0
  %1349 = vmatpush.bf16.msra.mxu0 0
  %1350 = vmatpush.bf16.msra.mxu0 0
  %1351 = vmatpush.bf16.msra.mxu0 0
  %1352 = vmatpush.bf16.msra.mxu0 %v1312
  %1353 = vmatpush.bf16.msra.mxu0 %v1284
  %1354 = vmatpush.bf16.msra.mxu0 %v1278
  %1355 = vmatpush.bf16.msra.mxu0 %v1272
  %1356 = vmatpush.bf16.msra.mxu0 %v1266
  %1357 = vmatmul.bf16.gmra.mxu0 %v1302
  %v1358 = vpop.f32.mrf.mxu0
  %v1359 = vadd.f32 %v1298, %v1358
  %v1360 = vpop.f32.mrf.mxu0
  %1361 = vdwg.mxu0
  %1362 = vmatpush.bf16.msra.mxu0 0
  %1363 = vmatpush.bf16.msra.mxu0 0
  %1364 = vmatpush.bf16.msra.mxu0 0
  %1365 = vmatpush.bf16.msra.mxu0 %v1315
  %1366 = vmatpush.bf16.msra.mxu0 %v1285
  %1367 = vmatpush.bf16.msra.mxu0 %v1279
  %1368 = vmatpush.bf16.msra.mxu0 %v1273
  %1369 = vmatpush.bf16.msra.mxu0 %v1267
  %1370 = vmatmul.bf16.gmra.mxu0 %v1302
  %v1371 = vpop.f32.mrf.mxu0
  %v1372 = vadd.f32 %v1298, %v1371
  %v1373 = vpop.f32.mrf.mxu0
  %1374 = vdwg.mxu0
  %1375 = vmatpush.bf16.msra.mxu0 0
  %1376 = vmatpush.bf16.msra.mxu0 0
  %1377 = vmatpush.bf16.msra.mxu0 0
  %1378 = vmatpush.bf16.msra.mxu0 %v1318
  %1379 = vmatpush.bf16.msra.mxu0 %v1286
  %1380 = vmatpush.bf16.msra.mxu0 %v1280
  %1381 = vmatpush.bf16.msra.mxu0 %v1274
  %1382 = vmatpush.bf16.msra.mxu0 %v1268
  %1383 = vmatmul.bf16.gmra.mxu0 %v1302
  %v1384 = vpop.f32.mrf.mxu0
  %v1385 = vadd.f32 %v1298, %v1384
  %v1386 = vpop.f32.mrf.mxu0
  %1387 = vdwg.mxu0
  %1388 = vmatpush.bf16.msra.mxu0 0
  %1389 = vmatpush.bf16.msra.mxu0 0
  %1390 = vmatpush.bf16.msra.mxu0 0
  %1391 = vmatpush.bf16.msra.mxu0 %v1321
  %1392 = vmatpush.bf16.msra.mxu0 %v1287
  %1393 = vmatpush.bf16.msra.mxu0 %v1281
  %1394 = vmatpush.bf16.msra.mxu0 %v1275
  %1395 = vmatpush.bf16.msra.mxu0 %v1269
  %1396 = vmatmul.bf16.gmra.mxu0 %v1302
  %v1397 = vpop.f32.mrf.mxu0
  %v1398 = vadd.f32 %v1298, %v1397
  %v1399 = vpop.f32.mrf.mxu0
  %1400 = vdwg.mxu0
  %v1401 = vmul.f32 %v1333, %v948
  %v1402 = vmul.f32 %v1346, %v949
  %v1403 = vmul.f32 %v1359, %v950
  %v1404 = vmul.f32 %v1372, %v951
  %v1405 = vmul.f32 %v1385, %v952
  %v1406 = vmul.f32 %v1398, %v953
  %v1407 = vadd.f32 %v1401, %v1402
  %v1408 = vadd.f32 %v1407, %v1403
  %v1409 = vadd.f32 %v1408, %v1404
  %v1410 = vadd.f32 %v1409, %v1405
  %v1411 = vsel %vm55, %v1406, 0.0
  %v1412 = vadd.f32 %v1410, %v1411
  %1413 = vadd.xlane.f32.xlu0 %v1412
  %v1414 = vpop.xlane.xlu0 %1413
  %v1415 = vmul.f32 %v1414, 0.001953125
  %v1416 = vsub.f32 %v1401, %v1415
  %v1417 = vsub.f32 %v1402, %v1415
  %v1418 = vsub.f32 %v1403, %v1415
  %v1419 = vsub.f32 %v1404, %v1415
  %v1420 = vsub.f32 %v1405, %v1415
  %v1421 = vsub.f32 %v1406, %v1415
  %v1422 = vmul.f32 %v1416, %v948
  %v1423 = vmul.f32 %v1417, %v949
  %v1424 = vmul.f32 %v1418, %v950
  %v1425 = vmul.f32 %v1419, %v951
  %v1426 = vmul.f32 %v1420, %v952
  %v1427 = vmul.f32 %v1421, %v953
  %v1428 = vmul.f32 %v1422, %v1422
  %v1429 = vmul.f32 %v1423, %v1423
  %v1430 = vmul.f32 %v1424, %v1424
  %v1431 = vmul.f32 %v1425, %v1425
  %v1432 = vmul.f32 %v1426, %v1426
  %v1433 = vmul.f32 %v1427, %v1427
  %v1434 = vadd.f32 %v1428, %v1429
  %v1435 = vadd.f32 %v1434, %v1430
  %v1436 = vadd.f32 %v1435, %v1431
  %v1437 = vadd.f32 %v1436, %v1432
  %v1438 = vsel %vm55, %v1433, 0.0
  %v1439 = vadd.f32 %v1437, %v1438
  %1440 = vadd.xlane.f32.xlu0 %v1439
  %v1441 = vpop.xlane.xlu0 %1440
  %v1442 = vmul.f32 %v1441, 0.001953125
  %v1443 = vld [vmem:[%s11] sm:$0xff]
  %v1444 = vadd.f32 %v1442, 1e-05
  %v1445 = vrsqrt.pop %v1444
  %v1446 = vmul.f32 %v1445, %v1444
  %v1447 = vmul.f32 %v1446, %v1445
  %v1448 = vmul.f32 0.5, %v1447
  %v1449 = vsub.f32 1.5, %v1448
  %v1450 = vmul.f32 %v1445, %v1449
  %vm1451 = vweird.f32 %v1444
  %vm1452 = vweird.f32 %v1445
  %vm1453 = vmor %vm1451, %vm1452
  %v1454 = vsel %vm1453, %v1445, %v1450
  %v1455 = vmul.f32 %v1443, %v1454
  %1457 = vset.pattern.permute.xlu0 0
  %1458 = vperm.xlu0 %1457, %v1455
  %v1459 = vpop.permute.xlu0 %1458
  %v1461 = vmul.f32 %v1422, %v1459
  %v1462 = vmul.f32 %v1423, %v1459
  %v1463 = vmul.f32 %v1424, %v1459
  %v1464 = vmul.f32 %v1425, %v1459
  %v1465 = vmul.f32 %v1426, %v1459
  %v1466 = vmul.f32 %v1427, %v1459
  %v1467 = vld [vmem:[%s12] sm:$0xff]
  %1469 = vset.pattern.permute.xlu0 0
  %1470 = vperm.xlu0 %1469, %v1467
  %v1471 = vpop.permute.xlu0 %1470
  %v1473 = vadd.f32 %v1461, %v1471
  %v1474 = vadd.f32 %v1462, %v1471
  %v1475 = vadd.f32 %v1463, %v1471
  %v1476 = vadd.f32 %v1464, %v1471
  %v1477 = vadd.f32 %v1465, %v1471
  %v1478 = vadd.f32 %v1466, %v1471
  %v1479 = vmax.f32 %v1473, 0.0
  %v1480 = vmax.f32 %v1474, 0.0
  %v1481 = vmax.f32 %v1475, 0.0
  %v1482 = vmax.f32 %v1476, 0.0
  %v1483 = vmax.f32 %v1477, 0.0
  %v1484 = vmax.f32 %v1478, 0.0
  %v1485 = vmul.f32 %v1479, %v948
  %v1486 = vmul.f32 %v1480, %v949
  %v1487 = vmul.f32 %v1481, %v950
  %v1488 = vmul.f32 %v1482, %v951
  %v1489 = vmul.f32 %v1483, %v952
  %v1490 = vmul.f32 %v1484, %v953
  %1491 = vst [vmem:[%s15] sm:$0xff] %v1485
  %1492 = vst [vmem:[%s15 + $0x8] sm:$0xff] %v1486
  %1493 = vst [vmem:[%s15 + $0x10] sm:$0xff] %v1487
  %1494 = vst [vmem:[%s15 + $0x18] sm:$0xff] %v1488
  %1495 = vst [vmem:[%s15 + $0x20] sm:$0xff] %v1489
  %1496 = vst.msk [vmem:[%s15 + $0x28] sm:$0xff] %vm55, %v1490
  // Predicated region
  $region62: #{upblock_forward.1} parent=0 // pred_check
    _
  $region63: #{upblock_forward.1} parent=0 // pred_check_branch
    %1498 = sbr.rel (0) target = $region65
  $region64: #{upblock_forward.1} parent=0 // pred_region
    _
  $region65: #{upblock_forward.1} parent=0 // pred_fallthru
    _
  // Predicated region
  $region66: #{upblock_forward.1} parent=0 // pred_check
    _
  $region67: #{upblock_forward.1} parent=0 // pred_check_branch
    %1500 = sbr.rel (0) target = $region69
  $region68: #{upblock_forward.1} parent=0 // pred_region
    _
  $region69: #{upblock_forward.1} parent=0 // pred_fallthru
    _

</llo_original>
